<compile_context>
chip_gen: v7x
topology: tpu7x:2x2x1
jax: 0.10.0
libtpu: 0.0.40
codegen_flags: <defaults>
</compile_context>

<pallas_src>
import jax
import jax.numpy as jnp
from jax.experimental import pallas as pl
from jax.experimental.pallas import tpu as pltpu


# ----------------------------- parameter packing ----------------------------


def _pack_rows(parts, width):
    """Stack 2-D params vertically; each part starts at an 8-aligned row.

    Returns (slab, {name: row_offset}).  Offsets are static Python ints.
    """
    offsets = {}
    blocks = []
    cur = 0
    for name, arr in parts:
        r, c = arr.shape
        offsets[name] = cur
        a = arr
        if c < width:
            a = jnp.pad(a, ((0, 0), (0, width - c)))
        pad_r = (-r) % 8
        if pad_r:
            a = jnp.pad(a, ((0, pad_r), (0, 0)))
        blocks.append(a)
        cur += r + pad_r
    return jnp.concatenate(blocks, axis=0).astype(jnp.float32), offsets


# ------------------------------- fused forward -------------------------------


def tennis_forward_impl(params, x, a_norm, hist, match_data, match_features):
    N, F = x.shape
    T = hist.shape[1]
    H = params["wl1"].shape[1]
    L = params["whh"].shape[0]
    C = params["wfc"].shape[1]
    MF = match_features.shape[1]
    M = match_data.shape[0]
    G = 4 * L

    # ---- LSTM gate reorder [i,f,g,o] -> [i,f,o,g] (fuses the 3 sigmoids) ----
    def reorder(w):
        i, f, g, o = jnp.split(w, 4, axis=-1)
        return jnp.concatenate([i, f, o, g], axis=-1)

    wih = reorder(params["wih"])          # (F, 4L)
    whh = reorder(params["whh"])          # (L, 4L)
    blstm = reorder(params["blstm"])      # (1, 4L)

    # block-diagonal expansion of wih so the input projection is a single
    # lane-dense (N, T*F) @ (T*F, T*4L) matmul.
    wih_bd = jnp.zeros((T * F, T * G), jnp.float32)
    for t in range(T):
        wih_bd = wih_bd.at[t * F:(t + 1) * F, t * G:(t + 1) * G].set(wih)
    blstm_t = jnp.tile(blstm, (1, T))                      # (1, T*4L)
    hist_flat = hist.reshape(N, T * F)                     # lane-dense history

    # ---- pad match features to a multiple of 8 lanes (keeps concat clean) ----
    mfp = (-MF) % 8
    mf_in = jnp.pad(match_features, ((0, 0), (0, mfp))).astype(jnp.float32)
    MFp = MF + mfp
    wm1_full = jnp.concatenate(
        [params["wm1"], jnp.zeros((mfp, C), jnp.float32)], axis=0)  # (2C+MFp, C)

    # ---- one-hot selection matrices: per-match player gather on the MXU ----
    sel = jax.nn.one_hot(
        jnp.concatenate([match_data[:, 0], match_data[:, 1]], axis=0),
        N, dtype=jnp.float32)                               # (2M, N)

    # ---- parameter slabs (3 DMAs total) ----
    slab_h, oh = _pack_rows(
        [("w1", jnp.concatenate([params["wl1"], params["wr1"]], axis=0)),
         ("b1", params["b1"]),
         ("w2", jnp.concatenate([params["wl2"], params["wr2"]], axis=0)),
         ("b2", params["b2"]),
         ("wproj", params["wproj"]), ("bproj", params["bproj"])], H)
    slab_l, ol = _pack_rows(
        [("wih", wih_bd), ("whh", whh), ("blstm", blstm_t)], T * G)
    # softmax over 2 logits == sigmoid of the logit difference
    wd = params["watt"][:, 0:1] - params["watt"][:, 1:2]    # (2H, 1)
    bd = params["batt"][:, 0:1] - params["batt"][:, 1:2]    # (1, 1)
    slab_c, oc = _pack_rows(
        [("wd", wd), ("bd", bd),
         ("wfc", params["wfc"]), ("bfc", params["bfc"]),
         ("wm1", wm1_full), ("bm1", params["bm1"]),
         ("wm2", params["wm2"]), ("bm2", params["bm2"])], C)

    def kernel(x_ref, a_ref, hist_ref, mf_ref, sel_ref,
               h_slab, l_slab, c_slab, out_ref):
        f32 = jnp.float32
        xin = x_ref[...]
        a = a_ref[...]

        # ---- SAGEConv 1: fused [aggr | x] @ [W_l ; W_r] + b, ReLU
        aggr1 = jnp.dot(a, xin, preferred_element_type=f32)
        h1 = jnp.maximum(
            jnp.dot(jnp.concatenate([aggr1, xin], axis=1),
                    h_slab[oh["w1"]:oh["w1"] + 2 * F, :],
                    preferred_element_type=f32)
            + h_slab[oh["b1"]:oh["b1"] + 1, :], 0.0)

        # ---- SAGEConv 2
        aggr2 = jnp.dot(a, h1, preferred_element_type=f32)
        x_gnn = jnp.maximum(
            jnp.dot(jnp.concatenate([aggr2, h1], axis=1),
                    h_slab[oh["w2"]:oh["w2"] + 2 * H, :],
                    preferred_element_type=f32)
            + h_slab[oh["b2"]:oh["b2"] + 1, :], 0.0)

        # ---- LSTM: lane-dense input projection once, then serial recurrence
        gates_x = (jnp.dot(hist_ref[...],
                           l_slab[ol["wih"]:ol["wih"] + T * F, :],
                           preferred_element_type=f32)
                   + l_slab[ol["blstm"]:ol["blstm"] + 1, :])       # (N, T*4L)
        whh_v = l_slab[ol["whh"]:ol["whh"] + L, 0:G]
        # TODO(synk): could hold whh in MXU weight registers across the T steps
        # (pltpu.matmul_push_rhs / matmul_acc_lhs); kept as jnp.dot for
        # portability across v5e/v6e/v7x.
        h = jnp.zeros((N, L), f32)
        c = jnp.zeros((N, L), f32)
        for t in range(T):                                  # static, unrolled
            g = gates_x[:, t * G:(t + 1) * G] + jnp.dot(
                h, whh_v, preferred_element_type=f32)
            sig = jax.nn.sigmoid(g[:, 0:3 * L])             # fused i, f, o
            c = sig[:, L:2 * L] * c + sig[:, 0:L] * jnp.tanh(g[:, 3 * L:4 * L])
            h = sig[:, 2 * L:3 * L] * jnp.tanh(c)
        # TODO(synk): PyTorch pack_padded_sequence would stop at each player's
        # true history length; here all histories are consumed for T steps.

        lstm_proj = (jnp.dot(h, h_slab[oh["wproj"]:oh["wproj"] + L, :],
                             preferred_element_type=f32)
                     + h_slab[oh["bproj"]:oh["bproj"] + 1, :])

        # ---- attention fusion: softmax over 2 logits == sigmoid(l0 - l1)
        att0 = jax.nn.sigmoid(
            jnp.dot(jnp.concatenate([x_gnn, lstm_proj], axis=1),
                    c_slab[oc["wd"]:oc["wd"] + 2 * H, 0:1],
                    preferred_element_type=f32)
            + c_slab[oc["bd"]:oc["bd"] + 1, 0:1])
        fused = att0 * x_gnn + (1.0 - att0) * lstm_proj

        # ---- fc_player (dropout == identity at eval); kept in registers
        pemb = (jnp.dot(fused, c_slab[oc["wfc"]:oc["wfc"] + H, :],
                        preferred_element_type=f32)
                + c_slab[oc["bfc"]:oc["bfc"] + 1, :])        # (N, C)

        # ---- per-match gather via one-hot matmul (no scalar loop)
        pboth = jnp.dot(sel_ref[...], pemb, preferred_element_type=f32)  # (2M,C)
        hm_in = jnp.concatenate(
            [pboth[0:M, :], pboth[M:2 * M, :], mf_ref[...]], axis=1)     # (M,2C+MFp)

        # ---- match head: Linear -> ReLU -> Linear -> sigmoid (one fused matmul)
        hm = jnp.maximum(
            jnp.dot(hm_in, c_slab[oc["wm1"]:oc["wm1"] + 2 * C + MFp, :],
                    preferred_element_type=f32)
            + c_slab[oc["bm1"]:oc["bm1"] + 1, :], 0.0)
        out_ref[...] = jax.nn.sigmoid(
            jnp.dot(hm, c_slab[oc["wm2"]:oc["wm2"] + C, 0:1],
                    preferred_element_type=f32)
            + c_slab[oc["bm2"]:oc["bm2"] + 1, 0:1])

    vmem = pl.BlockSpec(memory_space=pltpu.MemorySpace.VMEM)

    # advisory cost estimate (scheduling hygiene)
    flops = 2 * (N * N * F + N * 2 * F * H + N * N * H + N * 2 * H * H
                 + N * T * F * 4 * L + T * N * L * 4 * L
                 + N * L * H + N * 2 * H + N * H * C
                 + 2 * M * N * C + M * (2 * C + MFp) * C + M * C)
    transcendentals = N * T * 5 * L + N + M
    bytes_accessed = 4 * (x.size + a_norm.size + hist_flat.size + mf_in.size
                          + sel.size + slab_h.size + slab_l.size + slab_c.size
                          + M)

    # TODO(synk): if N / M ever grow, add a row grid with
    # dimension_semantics=("parallel",) and tile a_norm so the dense adjacency
    # does not have to be VMEM-resident (v7x has only 64 MiB VMEM).  At the
    # current sizes the working set is << 1 MiB and the kernel is latency
    # bound, so no grid / no extra buffering.
    return pl.pallas_call(
        kernel,
        out_shape=jax.ShapeDtypeStruct((M, 1), jnp.float32),
        in_specs=[vmem] * 8,
        out_specs=vmem,
        cost_estimate=pl.CostEstimate(flops=flops,
                                      transcendentals=transcendentals,
                                      bytes_accessed=bytes_accessed),
    )(x, a_norm, hist_flat, mf_in, sel, slab_h, slab_l, slab_c)


tennis_forward = jax.jit(tennis_forward_impl)


# ----------------------------- pure-JAX reference ---------------------------


def reference_forward(params, x, a_norm, hist, match_data, match_features):
    aggr1 = a_norm @ x
    h1 = jax.nn.relu(aggr1 @ params["wl1"] + x @ params["wr1"] + params["b1"])
    aggr2 = a_norm @ h1
    x_gnn = jax.nn.relu(aggr2 @ params["wl2"] + h1 @ params["wr2"] + params["b2"])

    n, t_max, _ = hist.shape
    l = params["whh"].shape[0]
    h = jnp.zeros((n, l), jnp.float32)
    c = jnp.zeros((n, l), jnp.float32)
    for t in range(t_max):
        gates = hist[:, t, :] @ params["wih"] + h @ params["whh"] + params["blstm"]
        i_g = jax.nn.sigmoid(gates[:, 0 * l:1 * l])
        f_g = jax.nn.sigmoid(gates[:, 1 * l:2 * l])
        g_g = jnp.tanh(gates[:, 2 * l:3 * l])
        o_g = jax.nn.sigmoid(gates[:, 3 * l:4 * l])
        c = f_g * c + i_g * g_g
        h = o_g * jnp.tanh(c)

    lstm_proj = h @ params["wproj"] + params["bproj"]
    fusion = jnp.concatenate([x_gnn, lstm_proj], axis=1)
    att = jax.nn.softmax(fusion @ params["watt"] + params["batt"], axis=1)
    fused = att[:, 0:1] * x_gnn + att[:, 1:2] * lstm_proj
    player_emb = fused @ params["wfc"] + params["bfc"]

    p1 = player_emb[match_data[:, 0]]
    p2 = player_emb[match_data[:, 1]]
    mi = jnp.concatenate([p1, p2, match_features], axis=1)
    hm = jax.nn.relu(mi @ params["wm1"] + params["bm1"])
    return jax.nn.sigmoid(hm @ params["wm2"] + params["bm2"])


# --------------------------------- main --------------------------------------

if __name__ == "__main__":
    # sizes
    N = 16          # num players
    F = 4           # feature_dim
    H = 32          # hidden_dim (GNN)
    L = 16          # lstm_dim
    C = 16          # combined_dim
    MF = 15         # match_feat_dim
    T = 8           # padded history length
    M = 8           # number of matches
    E = 40          # number of directed edges

    key = jax.random.PRNGKey(0)
    ks = jax.random.split(key, 32)

    def nrm(k, shape, scale=0.1):
        return (scale * jax.random.normal(k, shape)).astype(jnp.float32)

    params = {
        # SAGEConv1: lin_l (aggregated, with bias), lin_r (root, no bias)
        "wl1": nrm(ks[0], (F, H)), "wr1": nrm(ks[1], (F, H)), "b1": nrm(ks[2], (1, H)),
        # SAGEConv2
        "wl2": nrm(ks[3], (H, H)), "wr2": nrm(ks[4], (H, H)), "b2": nrm(ks[5], (1, H)),
        # LSTM (gate order i, f, g, o); blstm = b_ih + b_hh folded together
        "wih": nrm(ks[6], (F, 4 * L)), "whh": nrm(ks[7], (L, 4 * L)),
        "blstm": nrm(ks[8], (1, 4 * L)),
        # lstm_proj
        "wproj": nrm(ks[9], (L, H)), "bproj": nrm(ks[10], (1, H)),
        # att_layer
        "watt": nrm(ks[11], (2 * H, 2)), "batt": nrm(ks[12], (1, 2)),
        # fc_player
        "wfc": nrm(ks[13], (H, C)), "bfc": nrm(ks[14], (1, C)),
        # fc_match
        "wm1": nrm(ks[15], (2 * C + MF, C)), "bm1": nrm(ks[16], (1, C)),
        "wm2": nrm(ks[17], (C, 1)), "bm2": nrm(ks[18], (1, 1)),
    }

    # inputs
    x = nrm(ks[19], (N, F), scale=1.0)                                  # node features
    src = jax.random.randint(ks[20], (E,), 0, N)
    dst = jax.random.randint(ks[21], (E,), 0, N)
    # dense mean-aggregation matrix: messages flow src -> dst (PyG convention)
    adj = jnp.zeros((N, N), jnp.float32).at[dst, src].add(1.0)
    deg = adj.sum(axis=1, keepdims=True)
    a_norm = jnp.where(deg > 0, adj / jnp.maximum(deg, 1.0), 0.0)
    # padded player histories (pad_sequence result), here all length T
    hist = nrm(ks[22], (N, T, F), scale=1.0)
    match_data = jax.random.randint(ks[23], (M, 2), 0, N).astype(jnp.int32)
    match_features = nrm(ks[24], (M, MF), scale=1.0)

    # TODO(synk): dropout layers are treated as identity (inference mode).

    out = tennis_forward(params, x, a_norm, hist, match_data, match_features)
    out = jax.block_until_ready(out)

    ref = reference_forward(params, x, a_norm, hist, match_data, match_features)
    assert out.shape == (M, 1)
    assert bool(jnp.all(jnp.isfinite(out)))
    assert bool(jnp.allclose(out, ref, atol=1e-3, rtol=1e-3)), (out, ref)

    print("KERNEL_OK")
</pallas_src>

<mosaic_0001>
module attributes {stable_mosaic.version = 11 : i64} {
  func.func @kernel(%arg0: memref<16x4xf32, #tpu.memory_space<vmem>>, %arg1: memref<16x16xf32, #tpu.memory_space<vmem>>, %arg2: memref<16x32xf32, #tpu.memory_space<vmem>>, %arg3: memref<8x16xf32, #tpu.memory_space<vmem>>, %arg4: memref<16x16xf32, #tpu.memory_space<vmem>>, %arg5: memref<112x32xf32, #tpu.memory_space<vmem>>, %arg6: memref<56x512xf32, #tpu.memory_space<vmem>>, %arg7: memref<192x16xf32, #tpu.memory_space<vmem>>, %arg8: memref<8x1xf32, #tpu.memory_space<vmem>>) attributes {dimension_semantics = [], scalar_prefetch = 0 : i64, scratch_operands = 0 : i64, tpu.core_type = #tpu.core_type<tc>} {
    %c0 = arith.constant 0 : index
    %c0_0 = arith.constant 0 : index
    %0 = vector.load %arg0[%c0, %c0_0] : memref<16x4xf32, #tpu.memory_space<vmem>>, vector<16x4xf32>
    %c0_1 = arith.constant 0 : index
    %c0_2 = arith.constant 0 : index
    %1 = vector.load %arg1[%c0_1, %c0_2] : memref<16x16xf32, #tpu.memory_space<vmem>>, vector<16x16xf32>
    %cst = arith.constant dense<0.000000e+00> : vector<16x4xf32>
    %2 = tpu.matmul %1, %0, %cst {dimension_numbers = #tpu.dot_dimension_numbers<[1], [0], [0], [1], [0, 0, 1, 1], [], []>} : vector<16x16xf32>, vector<16x4xf32>, vector<16x4xf32> -> vector<16x4xf32>
    %3 = tpu.concatenate %2, %0 in 1 : vector<16x4xf32>, vector<16x4xf32> -> vector<16x8xf32>
    %c0_3 = arith.constant 0 : index
    %c0_4 = arith.constant 0 : index
    %4 = vector.load %arg5[%c0_3, %c0_4] : memref<112x32xf32, #tpu.memory_space<vmem>>, vector<8x32xf32>
    %cst_5 = arith.constant dense<0.000000e+00> : vector<16x32xf32>
    %5 = tpu.matmul %3, %4, %cst_5 {dimension_numbers = #tpu.dot_dimension_numbers<[1], [0], [0], [1], [0, 0, 1, 1], [], []>} : vector<16x8xf32>, vector<8x32xf32>, vector<16x32xf32> -> vector<16x32xf32>
    %c8 = arith.constant 8 : index
    %c0_6 = arith.constant 0 : index
    %6 = vector.load %arg5[%c8, %c0_6] : memref<112x32xf32, #tpu.memory_space<vmem>>, vector<1x32xf32>
    %7 = vector.broadcast %6 : vector<1x32xf32> to vector<16x32xf32>
    %8 = arith.addf %5, %7 : vector<16x32xf32>
    %cst_7 = arith.constant 0.000000e+00 : f32
    %9 = vector.broadcast %cst_7 : f32 to vector<16x32xf32>
    %10 = arith.maximumf %8, %9 : vector<16x32xf32>
    %cst_8 = arith.constant dense<0.000000e+00> : vector<16x32xf32>
    %11 = tpu.matmul %1, %10, %cst_8 {dimension_numbers = #tpu.dot_dimension_numbers<[1], [0], [0], [1], [0, 0, 1, 1], [], []>} : vector<16x16xf32>, vector<16x32xf32>, vector<16x32xf32> -> vector<16x32xf32>
    %12 = tpu.concatenate %11, %10 in 1 : vector<16x32xf32>, vector<16x32xf32> -> vector<16x64xf32>
    %c16 = arith.constant 16 : index
    %c0_9 = arith.constant 0 : index
    %13 = vector.load %arg5[%c16, %c0_9] : memref<112x32xf32, #tpu.memory_space<vmem>>, vector<64x32xf32>
    %cst_10 = arith.constant dense<0.000000e+00> : vector<16x32xf32>
    %14 = tpu.matmul %12, %13, %cst_10 {dimension_numbers = #tpu.dot_dimension_numbers<[1], [0], [0], [1], [0, 0, 1, 1], [], []>} : vector<16x64xf32>, vector<64x32xf32>, vector<16x32xf32> -> vector<16x32xf32>
    %c80 = arith.constant 80 : index
    %c0_11 = arith.constant 0 : index
    %15 = vector.load %arg5[%c80, %c0_11] : memref<112x32xf32, #tpu.memory_space<vmem>>, vector<1x32xf32>
    %16 = vector.broadcast %15 : vector<1x32xf32> to vector<16x32xf32>
    %17 = arith.addf %14, %16 : vector<16x32xf32>
    %cst_12 = arith.constant 0.000000e+00 : f32
    %18 = vector.broadcast %cst_12 : f32 to vector<16x32xf32>
    %19 = arith.maximumf %17, %18 : vector<16x32xf32>
    %c0_13 = arith.constant 0 : index
    %c0_14 = arith.constant 0 : index
    %20 = vector.load %arg2[%c0_13, %c0_14] : memref<16x32xf32, #tpu.memory_space<vmem>>, vector<16x32xf32>
    %c0_15 = arith.constant 0 : index
    %c0_16 = arith.constant 0 : index
    %21 = vector.load %arg6[%c0_15, %c0_16] : memref<56x512xf32, #tpu.memory_space<vmem>>, vector<32x512xf32>
    %cst_17 = arith.constant dense<0.000000e+00> : vector<16x512xf32>
    %22 = tpu.matmul %20, %21, %cst_17 {dimension_numbers = #tpu.dot_dimension_numbers<[1], [0], [0], [1], [0, 0, 1, 1], [], []>} : vector<16x32xf32>, vector<32x512xf32>, vector<16x512xf32> -> vector<16x512xf32>
    %c48 = arith.constant 48 : index
    %c0_18 = arith.constant 0 : index
    %23 = vector.load %arg6[%c48, %c0_18] : memref<56x512xf32, #tpu.memory_space<vmem>>, vector<1x512xf32>
    %24 = vector.broadcast %23 : vector<1x512xf32> to vector<16x512xf32>
    %25 = arith.addf %22, %24 : vector<16x512xf32>
    %c32 = arith.constant 32 : index
    %c0_19 = arith.constant 0 : index
    %26 = vector.load %arg6[%c32, %c0_19] : memref<56x512xf32, #tpu.memory_space<vmem>>, vector<16x64xf32>
    %cst_20 = arith.constant 0.000000e+00 : f32
    %27 = vector.broadcast %cst_20 : f32 to vector<16x16xf32>
    %cst_21 = arith.constant 0.000000e+00 : f32
    %28 = vector.broadcast %cst_21 : f32 to vector<16x16xf32>
    %29 = vector.extract_strided_slice %25 {offsets = [0, 0], sizes = [16, 64], strides = [1, 1]} : vector<16x512xf32> to vector<16x64xf32>
    %cst_22 = arith.constant dense<0.000000e+00> : vector<16x64xf32>
    %30 = tpu.matmul %27, %26, %cst_22 {dimension_numbers = #tpu.dot_dimension_numbers<[1], [0], [0], [1], [0, 0, 1, 1], [], []>} : vector<16x16xf32>, vector<16x64xf32>, vector<16x64xf32> -> vector<16x64xf32>
    %31 = arith.addf %29, %30 : vector<16x64xf32>
    %32 = vector.extract_strided_slice %31 {offsets = [0, 0], sizes = [16, 48], strides = [1, 1]} : vector<16x64xf32> to vector<16x48xf32>
    %33 = arith.negf %32 : vector<16x48xf32>
    %34 = math.exp %33 : vector<16x48xf32>
    %cst_23 = arith.constant 1.000000e+00 : f32
    %35 = vector.broadcast %cst_23 : f32 to vector<16x48xf32>
    %36 = arith.addf %35, %34 : vector<16x48xf32>
    %37 = arith.divf %35, %36 : vector<16x48xf32>
    %38 = vector.extract_strided_slice %37 {offsets = [0, 16], sizes = [16, 16], strides = [1, 1]} : vector<16x48xf32> to vector<16x16xf32>
    %39 = arith.mulf %38, %28 : vector<16x16xf32>
    %40 = vector.extract_strided_slice %37 {offsets = [0, 0], sizes = [16, 16], strides = [1, 1]} : vector<16x48xf32> to vector<16x16xf32>
    %41 = vector.extract_strided_slice %31 {offsets = [0, 48], sizes = [16, 16], strides = [1, 1]} : vector<16x64xf32> to vector<16x16xf32>
    %42 = math.tanh %41 : vector<16x16xf32>
    %43 = arith.mulf %40, %42 : vector<16x16xf32>
    %44 = arith.addf %39, %43 : vector<16x16xf32>
    %45 = vector.extract_strided_slice %37 {offsets = [0, 32], sizes = [16, 16], strides = [1, 1]} : vector<16x48xf32> to vector<16x16xf32>
    %46 = math.tanh %44 : vector<16x16xf32>
    %47 = arith.mulf %45, %46 : vector<16x16xf32>
    %48 = vector.extract_strided_slice %25 {offsets = [0, 64], sizes = [16, 64], strides = [1, 1]} : vector<16x512xf32> to vector<16x64xf32>
    %cst_24 = arith.constant dense<0.000000e+00> : vector<16x64xf32>
    %49 = tpu.matmul %47, %26, %cst_24 {dimension_numbers = #tpu.dot_dimension_numbers<[1], [0], [0], [1], [0, 0, 1, 1], [], []>} : vector<16x16xf32>, vector<16x64xf32>, vector<16x64xf32> -> vector<16x64xf32>
    %50 = arith.addf %48, %49 : vector<16x64xf32>
    %51 = vector.extract_strided_slice %50 {offsets = [0, 0], sizes = [16, 48], strides = [1, 1]} : vector<16x64xf32> to vector<16x48xf32>
    %52 = arith.negf %51 : vector<16x48xf32>
    %53 = math.exp %52 : vector<16x48xf32>
    %cst_25 = arith.constant 1.000000e+00 : f32
    %54 = vector.broadcast %cst_25 : f32 to vector<16x48xf32>
    %55 = arith.addf %54, %53 : vector<16x48xf32>
    %56 = arith.divf %54, %55 : vector<16x48xf32>
    %57 = vector.extract_strided_slice %56 {offsets = [0, 16], sizes = [16, 16], strides = [1, 1]} : vector<16x48xf32> to vector<16x16xf32>
    %58 = arith.mulf %57, %44 : vector<16x16xf32>
    %59 = vector.extract_strided_slice %56 {offsets = [0, 0], sizes = [16, 16], strides = [1, 1]} : vector<16x48xf32> to vector<16x16xf32>
    %60 = vector.extract_strided_slice %50 {offsets = [0, 48], sizes = [16, 16], strides = [1, 1]} : vector<16x64xf32> to vector<16x16xf32>
    %61 = math.tanh %60 : vector<16x16xf32>
    %62 = arith.mulf %59, %61 : vector<16x16xf32>
    %63 = arith.addf %58, %62 : vector<16x16xf32>
    %64 = vector.extract_strided_slice %56 {offsets = [0, 32], sizes = [16, 16], strides = [1, 1]} : vector<16x48xf32> to vector<16x16xf32>
    %65 = math.tanh %63 : vector<16x16xf32>
    %66 = arith.mulf %64, %65 : vector<16x16xf32>
    %67 = vector.extract_strided_slice %25 {offsets = [0, 128], sizes = [16, 64], strides = [1, 1]} : vector<16x512xf32> to vector<16x64xf32>
    %cst_26 = arith.constant dense<0.000000e+00> : vector<16x64xf32>
    %68 = tpu.matmul %66, %26, %cst_26 {dimension_numbers = #tpu.dot_dimension_numbers<[1], [0], [0], [1], [0, 0, 1, 1], [], []>} : vector<16x16xf32>, vector<16x64xf32>, vector<16x64xf32> -> vector<16x64xf32>
    %69 = arith.addf %67, %68 : vector<16x64xf32>
    %70 = vector.extract_strided_slice %69 {offsets = [0, 0], sizes = [16, 48], strides = [1, 1]} : vector<16x64xf32> to vector<16x48xf32>
    %71 = arith.negf %70 : vector<16x48xf32>
    %72 = math.exp %71 : vector<16x48xf32>
    %cst_27 = arith.constant 1.000000e+00 : f32
    %73 = vector.broadcast %cst_27 : f32 to vector<16x48xf32>
    %74 = arith.addf %73, %72 : vector<16x48xf32>
    %75 = arith.divf %73, %74 : vector<16x48xf32>
    %76 = vector.extract_strided_slice %75 {offsets = [0, 16], sizes = [16, 16], strides = [1, 1]} : vector<16x48xf32> to vector<16x16xf32>
    %77 = arith.mulf %76, %63 : vector<16x16xf32>
    %78 = vector.extract_strided_slice %75 {offsets = [0, 0], sizes = [16, 16], strides = [1, 1]} : vector<16x48xf32> to vector<16x16xf32>
    %79 = vector.extract_strided_slice %69 {offsets = [0, 48], sizes = [16, 16], strides = [1, 1]} : vector<16x64xf32> to vector<16x16xf32>
    %80 = math.tanh %79 : vector<16x16xf32>
    %81 = arith.mulf %78, %80 : vector<16x16xf32>
    %82 = arith.addf %77, %81 : vector<16x16xf32>
    %83 = vector.extract_strided_slice %75 {offsets = [0, 32], sizes = [16, 16], strides = [1, 1]} : vector<16x48xf32> to vector<16x16xf32>
    %84 = math.tanh %82 : vector<16x16xf32>
    %85 = arith.mulf %83, %84 : vector<16x16xf32>
    %86 = vector.extract_strided_slice %25 {offsets = [0, 192], sizes = [16, 64], strides = [1, 1]} : vector<16x512xf32> to vector<16x64xf32>
    %cst_28 = arith.constant dense<0.000000e+00> : vector<16x64xf32>
    %87 = tpu.matmul %85, %26, %cst_28 {dimension_numbers = #tpu.dot_dimension_numbers<[1], [0], [0], [1], [0, 0, 1, 1], [], []>} : vector<16x16xf32>, vector<16x64xf32>, vector<16x64xf32> -> vector<16x64xf32>
    %88 = arith.addf %86, %87 : vector<16x64xf32>
    %89 = vector.extract_strided_slice %88 {offsets = [0, 0], sizes = [16, 48], strides = [1, 1]} : vector<16x64xf32> to vector<16x48xf32>
    %90 = arith.negf %89 : vector<16x48xf32>
    %91 = math.exp %90 : vector<16x48xf32>
    %cst_29 = arith.constant 1.000000e+00 : f32
    %92 = vector.broadcast %cst_29 : f32 to vector<16x48xf32>
    %93 = arith.addf %92, %91 : vector<16x48xf32>
    %94 = arith.divf %92, %93 : vector<16x48xf32>
    %95 = vector.extract_strided_slice %94 {offsets = [0, 16], sizes = [16, 16], strides = [1, 1]} : vector<16x48xf32> to vector<16x16xf32>
    %96 = arith.mulf %95, %82 : vector<16x16xf32>
    %97 = vector.extract_strided_slice %94 {offsets = [0, 0], sizes = [16, 16], strides = [1, 1]} : vector<16x48xf32> to vector<16x16xf32>
    %98 = vector.extract_strided_slice %88 {offsets = [0, 48], sizes = [16, 16], strides = [1, 1]} : vector<16x64xf32> to vector<16x16xf32>
    %99 = math.tanh %98 : vector<16x16xf32>
    %100 = arith.mulf %97, %99 : vector<16x16xf32>
    %101 = arith.addf %96, %100 : vector<16x16xf32>
    %102 = vector.extract_strided_slice %94 {offsets = [0, 32], sizes = [16, 16], strides = [1, 1]} : vector<16x48xf32> to vector<16x16xf32>
    %103 = math.tanh %101 : vector<16x16xf32>
    %104 = arith.mulf %102, %103 : vector<16x16xf32>
    %105 = vector.extract_strided_slice %25 {offsets = [0, 256], sizes = [16, 64], strides = [1, 1]} : vector<16x512xf32> to vector<16x64xf32>
    %cst_30 = arith.constant dense<0.000000e+00> : vector<16x64xf32>
    %106 = tpu.matmul %104, %26, %cst_30 {dimension_numbers = #tpu.dot_dimension_numbers<[1], [0], [0], [1], [0, 0, 1, 1], [], []>} : vector<16x16xf32>, vector<16x64xf32>, vector<16x64xf32> -> vector<16x64xf32>
    %107 = arith.addf %105, %106 : vector<16x64xf32>
    %108 = vector.extract_strided_slice %107 {offsets = [0, 0], sizes = [16, 48], strides = [1, 1]} : vector<16x64xf32> to vector<16x48xf32>
    %109 = arith.negf %108 : vector<16x48xf32>
    %110 = math.exp %109 : vector<16x48xf32>
    %cst_31 = arith.constant 1.000000e+00 : f32
    %111 = vector.broadcast %cst_31 : f32 to vector<16x48xf32>
    %112 = arith.addf %111, %110 : vector<16x48xf32>
    %113 = arith.divf %111, %112 : vector<16x48xf32>
    %114 = vector.extract_strided_slice %113 {offsets = [0, 16], sizes = [16, 16], strides = [1, 1]} : vector<16x48xf32> to vector<16x16xf32>
    %115 = arith.mulf %114, %101 : vector<16x16xf32>
    %116 = vector.extract_strided_slice %113 {offsets = [0, 0], sizes = [16, 16], strides = [1, 1]} : vector<16x48xf32> to vector<16x16xf32>
    %117 = vector.extract_strided_slice %107 {offsets = [0, 48], sizes = [16, 16], strides = [1, 1]} : vector<16x64xf32> to vector<16x16xf32>
    %118 = math.tanh %117 : vector<16x16xf32>
    %119 = arith.mulf %116, %118 : vector<16x16xf32>
    %120 = arith.addf %115, %119 : vector<16x16xf32>
    %121 = vector.extract_strided_slice %113 {offsets = [0, 32], sizes = [16, 16], strides = [1, 1]} : vector<16x48xf32> to vector<16x16xf32>
    %122 = math.tanh %120 : vector<16x16xf32>
    %123 = arith.mulf %121, %122 : vector<16x16xf32>
    %124 = vector.extract_strided_slice %25 {offsets = [0, 320], sizes = [16, 64], strides = [1, 1]} : vector<16x512xf32> to vector<16x64xf32>
    %cst_32 = arith.constant dense<0.000000e+00> : vector<16x64xf32>
    %125 = tpu.matmul %123, %26, %cst_32 {dimension_numbers = #tpu.dot_dimension_numbers<[1], [0], [0], [1], [0, 0, 1, 1], [], []>} : vector<16x16xf32>, vector<16x64xf32>, vector<16x64xf32> -> vector<16x64xf32>
    %126 = arith.addf %124, %125 : vector<16x64xf32>
    %127 = vector.extract_strided_slice %126 {offsets = [0, 0], sizes = [16, 48], strides = [1, 1]} : vector<16x64xf32> to vector<16x48xf32>
    %128 = arith.negf %127 : vector<16x48xf32>
    %129 = math.exp %128 : vector<16x48xf32>
    %cst_33 = arith.constant 1.000000e+00 : f32
    %130 = vector.broadcast %cst_33 : f32 to vector<16x48xf32>
    %131 = arith.addf %130, %129 : vector<16x48xf32>
    %132 = arith.divf %130, %131 : vector<16x48xf32>
    %133 = vector.extract_strided_slice %132 {offsets = [0, 16], sizes = [16, 16], strides = [1, 1]} : vector<16x48xf32> to vector<16x16xf32>
    %134 = arith.mulf %133, %120 : vector<16x16xf32>
    %135 = vector.extract_strided_slice %132 {offsets = [0, 0], sizes = [16, 16], strides = [1, 1]} : vector<16x48xf32> to vector<16x16xf32>
    %136 = vector.extract_strided_slice %126 {offsets = [0, 48], sizes = [16, 16], strides = [1, 1]} : vector<16x64xf32> to vector<16x16xf32>
    %137 = math.tanh %136 : vector<16x16xf32>
    %138 = arith.mulf %135, %137 : vector<16x16xf32>
    %139 = arith.addf %134, %138 : vector<16x16xf32>
    %140 = vector.extract_strided_slice %132 {offsets = [0, 32], sizes = [16, 16], strides = [1, 1]} : vector<16x48xf32> to vector<16x16xf32>
    %141 = math.tanh %139 : vector<16x16xf32>
    %142 = arith.mulf %140, %141 : vector<16x16xf32>
    %143 = vector.extract_strided_slice %25 {offsets = [0, 384], sizes = [16, 64], strides = [1, 1]} : vector<16x512xf32> to vector<16x64xf32>
    %cst_34 = arith.constant dense<0.000000e+00> : vector<16x64xf32>
    %144 = tpu.matmul %142, %26, %cst_34 {dimension_numbers = #tpu.dot_dimension_numbers<[1], [0], [0], [1], [0, 0, 1, 1], [], []>} : vector<16x16xf32>, vector<16x64xf32>, vector<16x64xf32> -> vector<16x64xf32>
    %145 = arith.addf %143, %144 : vector<16x64xf32>
    %146 = vector.extract_strided_slice %145 {offsets = [0, 0], sizes = [16, 48], strides = [1, 1]} : vector<16x64xf32> to vector<16x48xf32>
    %147 = arith.negf %146 : vector<16x48xf32>
    %148 = math.exp %147 : vector<16x48xf32>
    %cst_35 = arith.constant 1.000000e+00 : f32
    %149 = vector.broadcast %cst_35 : f32 to vector<16x48xf32>
    %150 = arith.addf %149, %148 : vector<16x48xf32>
    %151 = arith.divf %149, %150 : vector<16x48xf32>
    %152 = vector.extract_strided_slice %151 {offsets = [0, 16], sizes = [16, 16], strides = [1, 1]} : vector<16x48xf32> to vector<16x16xf32>
    %153 = arith.mulf %152, %139 : vector<16x16xf32>
    %154 = vector.extract_strided_slice %151 {offsets = [0, 0], sizes = [16, 16], strides = [1, 1]} : vector<16x48xf32> to vector<16x16xf32>
    %155 = vector.extract_strided_slice %145 {offsets = [0, 48], sizes = [16, 16], strides = [1, 1]} : vector<16x64xf32> to vector<16x16xf32>
    %156 = math.tanh %155 : vector<16x16xf32>
    %157 = arith.mulf %154, %156 : vector<16x16xf32>
    %158 = arith.addf %153, %157 : vector<16x16xf32>
    %159 = vector.extract_strided_slice %151 {offsets = [0, 32], sizes = [16, 16], strides = [1, 1]} : vector<16x48xf32> to vector<16x16xf32>
    %160 = math.tanh %158 : vector<16x16xf32>
    %161 = arith.mulf %159, %160 : vector<16x16xf32>
    %162 = vector.extract_strided_slice %25 {offsets = [0, 448], sizes = [16, 64], strides = [1, 1]} : vector<16x512xf32> to vector<16x64xf32>
    %cst_36 = arith.constant dense<0.000000e+00> : vector<16x64xf32>
    %163 = tpu.matmul %161, %26, %cst_36 {dimension_numbers = #tpu.dot_dimension_numbers<[1], [0], [0], [1], [0, 0, 1, 1], [], []>} : vector<16x16xf32>, vector<16x64xf32>, vector<16x64xf32> -> vector<16x64xf32>
    %164 = arith.addf %162, %163 : vector<16x64xf32>
    %165 = vector.extract_strided_slice %164 {offsets = [0, 0], sizes = [16, 48], strides = [1, 1]} : vector<16x64xf32> to vector<16x48xf32>
    %166 = arith.negf %165 : vector<16x48xf32>
    %167 = math.exp %166 : vector<16x48xf32>
    %cst_37 = arith.constant 1.000000e+00 : f32
    %168 = vector.broadcast %cst_37 : f32 to vector<16x48xf32>
    %169 = arith.addf %168, %167 : vector<16x48xf32>
    %170 = arith.divf %168, %169 : vector<16x48xf32>
    %171 = vector.extract_strided_slice %170 {offsets = [0, 16], sizes = [16, 16], strides = [1, 1]} : vector<16x48xf32> to vector<16x16xf32>
    %172 = arith.mulf %171, %158 : vector<16x16xf32>
    %173 = vector.extract_strided_slice %170 {offsets = [0, 0], sizes = [16, 16], strides = [1, 1]} : vector<16x48xf32> to vector<16x16xf32>
    %174 = vector.extract_strided_slice %164 {offsets = [0, 48], sizes = [16, 16], strides = [1, 1]} : vector<16x64xf32> to vector<16x16xf32>
    %175 = math.tanh %174 : vector<16x16xf32>
    %176 = arith.mulf %173, %175 : vector<16x16xf32>
    %177 = arith.addf %172, %176 : vector<16x16xf32>
    %178 = vector.extract_strided_slice %170 {offsets = [0, 32], sizes = [16, 16], strides = [1, 1]} : vector<16x48xf32> to vector<16x16xf32>
    %179 = math.tanh %177 : vector<16x16xf32>
    %180 = arith.mulf %178, %179 : vector<16x16xf32>
    %c88 = arith.constant 88 : index
    %c0_38 = arith.constant 0 : index
    %181 = vector.load %arg5[%c88, %c0_38] : memref<112x32xf32, #tpu.memory_space<vmem>>, vector<16x32xf32>
    %cst_39 = arith.constant dense<0.000000e+00> : vector<16x32xf32>
    %182 = tpu.matmul %180, %181, %cst_39 {dimension_numbers = #tpu.dot_dimension_numbers<[1], [0], [0], [1], [0, 0, 1, 1], [], []>} : vector<16x16xf32>, vector<16x32xf32>, vector<16x32xf32> -> vector<16x32xf32>
    %c104 = arith.constant 104 : index
    %c0_40 = arith.constant 0 : index
    %183 = vector.load %arg5[%c104, %c0_40] : memref<112x32xf32, #tpu.memory_space<vmem>>, vector<1x32xf32>
    %184 = vector.broadcast %183 : vector<1x32xf32> to vector<16x32xf32>
    %185 = arith.addf %182, %184 : vector<16x32xf32>
    %186 = tpu.concatenate %19, %185 in 1 : vector<16x32xf32>, vector<16x32xf32> -> vector<16x64xf32>
    %c0_41 = arith.constant 0 : index
    %c0_42 = arith.constant 0 : index
    %187 = vector.load %arg7[%c0_41, %c0_42] : memref<192x16xf32, #tpu.memory_space<vmem>>, vector<64x1xf32>
    %cst_43 = arith.constant dense<0.000000e+00> : vector<16x1xf32>
    %188 = tpu.matmul %186, %187, %cst_43 {dimension_numbers = #tpu.dot_dimension_numbers<[1], [0], [0], [1], [0, 0, 1, 1], [], []>} : vector<16x64xf32>, vector<64x1xf32>, vector<16x1xf32> -> vector<16x1xf32>
    %c64 = arith.constant 64 : index
    %c0_44 = arith.constant 0 : index
    %189 = vector.load %arg7[%c64, %c0_44] : memref<192x16xf32, #tpu.memory_space<vmem>>, vector<1x1xf32>
    %190 = vector.broadcast %189 : vector<1x1xf32> to vector<16x1xf32>
    %191 = arith.addf %188, %190 : vector<16x1xf32>
    %192 = arith.negf %191 : vector<16x1xf32>
    %193 = math.exp %192 : vector<16x1xf32>
    %cst_45 = arith.constant 1.000000e+00 : f32
    %194 = vector.broadcast %cst_45 : f32 to vector<16x1xf32>
    %195 = arith.addf %194, %193 : vector<16x1xf32>
    %196 = arith.divf %194, %195 : vector<16x1xf32>
    %197 = vector.broadcast %196 : vector<16x1xf32> to vector<16x32xf32>
    %198 = arith.mulf %197, %19 : vector<16x32xf32>
    %cst_46 = arith.constant 1.000000e+00 : f32
    %199 = vector.broadcast %cst_46 : f32 to vector<16x1xf32>
    %200 = arith.subf %199, %196 : vector<16x1xf32>
    %201 = vector.broadcast %200 : vector<16x1xf32> to vector<16x32xf32>
    %202 = arith.mulf %201, %185 : vector<16x32xf32>
    %203 = arith.addf %198, %202 : vector<16x32xf32>
    %c72 = arith.constant 72 : index
    %c0_47 = arith.constant 0 : index
    %204 = vector.load %arg7[%c72, %c0_47] : memref<192x16xf32, #tpu.memory_space<vmem>>, vector<32x16xf32>
    %cst_48 = arith.constant dense<0.000000e+00> : vector<16x16xf32>
    %205 = tpu.matmul %203, %204, %cst_48 {dimension_numbers = #tpu.dot_dimension_numbers<[1], [0], [0], [1], [0, 0, 1, 1], [], []>} : vector<16x32xf32>, vector<32x16xf32>, vector<16x16xf32> -> vector<16x16xf32>
    %c104_49 = arith.constant 104 : index
    %c0_50 = arith.constant 0 : index
    %206 = vector.load %arg7[%c104_49, %c0_50] : memref<192x16xf32, #tpu.memory_space<vmem>>, vector<1x16xf32>
    %207 = vector.broadcast %206 : vector<1x16xf32> to vector<16x16xf32>
    %208 = arith.addf %205, %207 : vector<16x16xf32>
    %c0_51 = arith.constant 0 : index
    %c0_52 = arith.constant 0 : index
    %209 = vector.load %arg4[%c0_51, %c0_52] : memref<16x16xf32, #tpu.memory_space<vmem>>, vector<16x16xf32>
    %cst_53 = arith.constant dense<0.000000e+00> : vector<16x16xf32>
    %210 = tpu.matmul %209, %208, %cst_53 {dimension_numbers = #tpu.dot_dimension_numbers<[1], [0], [0], [1], [0, 0, 1, 1], [], []>} : vector<16x16xf32>, vector<16x16xf32>, vector<16x16xf32> -> vector<16x16xf32>
    %211 = vector.extract_strided_slice %210 {offsets = [0, 0], sizes = [8, 16], strides = [1, 1]} : vector<16x16xf32> to vector<8x16xf32>
    %212 = vector.extract_strided_slice %210 {offsets = [8, 0], sizes = [8, 16], strides = [1, 1]} : vector<16x16xf32> to vector<8x16xf32>
    %c0_54 = arith.constant 0 : index
    %c0_55 = arith.constant 0 : index
    %213 = vector.load %arg3[%c0_54, %c0_55] : memref<8x16xf32, #tpu.memory_space<vmem>>, vector<8x16xf32>
    %214 = tpu.concatenate %211, %212, %213 in 1 : vector<8x16xf32>, vector<8x16xf32>, vector<8x16xf32> -> vector<8x48xf32>
    %c112 = arith.constant 112 : index
    %c0_56 = arith.constant 0 : index
    %215 = vector.load %arg7[%c112, %c0_56] : memref<192x16xf32, #tpu.memory_space<vmem>>, vector<48x16xf32>
    %cst_57 = arith.constant dense<0.000000e+00> : vector<8x16xf32>
    %216 = tpu.matmul %214, %215, %cst_57 {dimension_numbers = #tpu.dot_dimension_numbers<[1], [0], [0], [1], [0, 0, 1, 1], [], []>} : vector<8x48xf32>, vector<48x16xf32>, vector<8x16xf32> -> vector<8x16xf32>
    %c160 = arith.constant 160 : index
    %c0_58 = arith.constant 0 : index
    %217 = vector.load %arg7[%c160, %c0_58] : memref<192x16xf32, #tpu.memory_space<vmem>>, vector<1x16xf32>
    %218 = vector.broadcast %217 : vector<1x16xf32> to vector<8x16xf32>
    %219 = arith.addf %216, %218 : vector<8x16xf32>
    %cst_59 = arith.constant 0.000000e+00 : f32
    %220 = vector.broadcast %cst_59 : f32 to vector<8x16xf32>
    %221 = arith.maximumf %219, %220 : vector<8x16xf32>
    %c168 = arith.constant 168 : index
    %c0_60 = arith.constant 0 : index
    %222 = vector.load %arg7[%c168, %c0_60] : memref<192x16xf32, #tpu.memory_space<vmem>>, vector<16x1xf32>
    %cst_61 = arith.constant dense<0.000000e+00> : vector<8x1xf32>
    %223 = tpu.matmul %221, %222, %cst_61 {dimension_numbers = #tpu.dot_dimension_numbers<[1], [0], [0], [1], [0, 0, 1, 1], [], []>} : vector<8x16xf32>, vector<16x1xf32>, vector<8x1xf32> -> vector<8x1xf32>
    %c184 = arith.constant 184 : index
    %c0_62 = arith.constant 0 : index
    %224 = vector.load %arg7[%c184, %c0_62] : memref<192x16xf32, #tpu.memory_space<vmem>>, vector<1x1xf32>
    %225 = vector.broadcast %224 : vector<1x1xf32> to vector<8x1xf32>
    %226 = arith.addf %223, %225 : vector<8x1xf32>
    %227 = arith.negf %226 : vector<8x1xf32>
    %228 = math.exp %227 : vector<8x1xf32>
    %cst_63 = arith.constant 1.000000e+00 : f32
    %229 = vector.broadcast %cst_63 : f32 to vector<8x1xf32>
    %230 = arith.addf %229, %228 : vector<8x1xf32>
    %231 = arith.divf %229, %230 : vector<8x1xf32>
    %c0_64 = arith.constant 0 : index
    %c0_65 = arith.constant 0 : index
    %232 = vector.load %arg8[%c0_64, %c0_65] : memref<8x1xf32, #tpu.memory_space<vmem>>, vector<8x1xf32>
    tpu.vector_store %arg8[%c0_64, %c0_65], %231 {strides = array<i32>} : memref<8x1xf32, #tpu.memory_space<vmem>>, vector<8x1xf32>,
    return
  }
}

</mosaic_0001>

<llo_original>
// kernel: tennis_forward_impl.1
$region0: #{tennis_forward_impl.1}
  #allocation0 [shape = 'u32[]', space=smem, size = 0x4, offset = 0x4, fixed_abs, tag = 'smem constant byte address 0x4 - core index']
  #allocation1 [shape = 'u32[144,128]{1,0:T(1,128)}', space=vmem, size = 0x12000, scoped, tag = 'internal scratch']
  %s0 = inlined_call_operand.vmem [shape: f32[16,4], index: 0, kind: input, shape index: {}]
  %s1 = inlined_call_operand.vmem [shape: f32[16,16], index: 1, kind: input, shape index: {}]
  %s2 = inlined_call_operand.vmem [shape: f32[16,32], index: 2, kind: input, shape index: {}]
  %s3 = inlined_call_operand.vmem [shape: f32[8,16], index: 3, kind: input, shape index: {}]
  %s4 = inlined_call_operand.vmem [shape: f32[16,16], index: 4, kind: input, shape index: {}]
  %s5 = inlined_call_operand.vmem [shape: f32[112,32], index: 5, kind: input, shape index: {}]
  %s6 = inlined_call_operand.vmem [shape: f32[56,512], index: 6, kind: input, shape index: {}]
  %s7 = inlined_call_operand.vmem [shape: f32[192,16], index: 7, kind: input, shape index: {}]
  %s8 = inlined_call_operand.vmem [shape: f32[8,1], index: 8, kind: output, shape index: {}]
  %s9 = sld [smem:[#allocation0]]
  $region42: #{tennis_forward_impl.1} parent=0
    _
  %s11 = ssub.s32 1, %s9
  %s12 = scalar_select 0, %s11, %s9
  // Predicated region
  $region2: #{tennis_forward_impl.1} parent=0 // pred_check
    _
  $region3: #{tennis_forward_impl.1} parent=0 // pred_check_branch
    %14 = sbr.rel (0) target = $region5
  $region4: #{tennis_forward_impl.1} parent=0 // pred_region
    _
  $region5: #{tennis_forward_impl.1} parent=0 // pred_fallthru
    _
  // Predicated region
  $region6: #{tennis_forward_impl.1} parent=0 // pred_check
    _
  $region7: #{tennis_forward_impl.1} parent=0 // pred_check_branch
    %16 = sbr.rel (0) target = $region9
  $region8: #{tennis_forward_impl.1} parent=0 // pred_region
    _
  $region9: #{tennis_forward_impl.1} parent=0 // pred_fallthru
    _
  // Predicated region
  $region10: #{tennis_forward_impl.1} parent=0 // pred_check
    _
  $region11: #{tennis_forward_impl.1} parent=0 // pred_check_branch
    %18 = sbr.rel (0) target = $region13
  $region12: #{tennis_forward_impl.1} parent=0 // pred_region
    _
  $region13: #{tennis_forward_impl.1} parent=0 // pred_fallthru
    _
  // Predicated region
  $region14: #{tennis_forward_impl.1} parent=0 // pred_check
    _
  $region15: #{tennis_forward_impl.1} parent=0 // pred_check_branch
    %20 = sbr.rel (0) target = $region17
  $region16: #{tennis_forward_impl.1} parent=0 // pred_region
    _
  $region17: #{tennis_forward_impl.1} parent=0 // pred_fallthru
    _
  // Predicated region
  $region18: #{tennis_forward_impl.1} parent=0 // pred_check
    _
  $region19: #{tennis_forward_impl.1} parent=0 // pred_check_branch
    %22 = sbr.rel (0) target = $region21
  $region20: #{tennis_forward_impl.1} parent=0 // pred_region
    _
  $region21: #{tennis_forward_impl.1} parent=0 // pred_fallthru
    _
  // Predicated region
  $region22: #{tennis_forward_impl.1} parent=0 // pred_check
    _
  $region23: #{tennis_forward_impl.1} parent=0 // pred_check_branch
    %24 = sbr.rel (0) target = $region25
  $region24: #{tennis_forward_impl.1} parent=0 // pred_region
    _
  $region25: #{tennis_forward_impl.1} parent=0 // pred_fallthru
    _
  // Predicated region
  $region26: #{tennis_forward_impl.1} parent=0 // pred_check
    _
  $region27: #{tennis_forward_impl.1} parent=0 // pred_check_branch
    %26 = sbr.rel (0) target = $region29
  $region28: #{tennis_forward_impl.1} parent=0 // pred_region
    _
  $region29: #{tennis_forward_impl.1} parent=0 // pred_fallthru
    _
  // Predicated region
  $region30: #{tennis_forward_impl.1} parent=0 // pred_check
    _
  $region31: #{tennis_forward_impl.1} parent=0 // pred_check_branch
    %28 = sbr.rel (0) target = $region33
  $region32: #{tennis_forward_impl.1} parent=0 // pred_region
    _
  $region33: #{tennis_forward_impl.1} parent=0 // pred_fallthru
    _
  %v29 = vld [vmem:[%s0] sm:$0xff]
  %v30 = vld [vmem:[%s0 + $0x8] sm:$0xff]
  %v31 = vld [vmem:[%s1] sm:$0xff]
  %v32 = vld [vmem:[%s1 + $0x8] sm:$0xff]
  %vm33 = vcmask 130048
  %v35 = vsel %vm33, %v31, 0
  %v38 = vsel %vm33, %v32, 0
  %40 = vmatprep.subr.mxu0 0.0
  %41 = vmatpush1.msra.mxu0 %v29
  %42 = vmatprep.subr.mxu0 0.0
  %43 = vmatpush1.msra.mxu0 %v30
  %44 = vmatprep.subr.mxu0 0.0
  %45 = vmatpush1.msra.mxu0 0.0
  %46 = vmatprep.subr.mxu0 0.0
  %47 = vmatpush1.msra.mxu0 0.0
  %48 = vmatprep.subr.mxu0 0.0
  %49 = vmatpush1.msra.mxu0 0.0
  %50 = vmatprep.subr.mxu0 0.0
  %51 = vmatpush1.msra.mxu0 0.0
  %52 = vmatprep.subr.mxu0 0.0
  %53 = vmatpush1.msra.mxu0 0.0
  %54 = vmatprep.subr.mxu0 0.0
  %55 = vmatpush1.msra.mxu0 0.0
  %56 = vmatprep.subr.mxu0 0.0
  %57 = vmatpush1.msra.mxu0 0.0
  %58 = vmatprep.subr.mxu0 0.0
  %59 = vmatpush1.msra.mxu0 0.0
  %60 = vmatprep.subr.mxu0 0.0
  %61 = vmatpush1.msra.mxu0 0.0
  %62 = vmatprep.subr.mxu0 0.0
  %63 = vmatpush1.msra.mxu0 0.0
  %64 = vmatprep.subr.mxu0 0.0
  %65 = vmatpush1.msra.mxu0 0.0
  %66 = vmatprep.subr.mxu0 0.0
  %67 = vmatpush1.msra.mxu0 0.0
  %68 = vmatprep.subr.mxu0 0.0
  %69 = vmatpush1.msra.mxu0 0.0
  %70 = vmatprep.subr.mxu0 0.0
  %71 = vmatpush1.msra.mxu0 0.0
  %72 = vmatprep.subr.mxu0 0.0
  %73 = vmatpush1.msra.mxu0 0.0
  %74 = vmatprep.subr.mxu0 0.0
  %75 = vmatpush1.msra.mxu0 0.0
  %76 = vmatprep.subr.mxu0 0.0
  %77 = vmatpush1.msra.mxu0 0.0
  %78 = vmatprep.subr.mxu0 0.0
  %79 = vmatpush1.msra.mxu0 0.0
  %80 = vmatprep.subr.mxu0 0.0
  %81 = vmatpush1.msra.mxu0 0.0
  %82 = vmatprep.subr.mxu0 0.0
  %83 = vmatpush1.msra.mxu0 0.0
  %84 = vmatprep.subr.mxu0 0.0
  %85 = vmatpush1.msra.mxu0 0.0
  %86 = vmatprep.subr.mxu0 0.0
  %87 = vmatpush1.msra.mxu0 0.0
  %88 = vmatprep.subr.mxu0 0.0
  %89 = vmatpush1.msra.mxu0 0.0
  %90 = vmatprep.subr.mxu0 0.0
  %91 = vmatpush1.msra.mxu0 0.0
  %92 = vmatprep.subr.mxu0 0.0
  %93 = vmatpush1.msra.mxu0 0.0
  %94 = vmatprep.subr.mxu0 0.0
  %95 = vmatpush1.msra.mxu0 0.0
  %96 = vmatprep.subr.mxu0 0.0
  %97 = vmatpush1.msra.mxu0 0.0
  %98 = vmatprep.subr.mxu0 0.0
  %99 = vmatpush1.msra.mxu0 0.0
  %100 = vmatprep.subr.mxu0 0.0
  %101 = vmatpush1.msra.mxu0 0.0
  %102 = vmatprep.subr.mxu0 0.0
  %103 = vmatpush1.msra.mxu0 0.0
  %104 = vmatprep.mubr.f32.mxu0 0.0
  %105 = vmatmul.mubr.f32.gmra.mrb[0].mxu0 %v35
  %v106 = vpop.f32.mrb[0].mxu0
  %v107 = vadd.f32 0.0, %v106
  %v108 = vpop.f32.mrb[0].mxu0
  %109 = vmatprep.mubr.f32.mxu0 0.0
  %110 = vmatmul.mubr.f32.gmra.mrb[0].mxu0 %v38
  %v111 = vpop.f32.mrb[0].mxu0
  %v112 = vadd.f32 0.0, %v111
  %v113 = vpop.f32.mrb[0].mxu0
  %114 = vdwg.mxu0
  %117 = vrot.lane.b32.xlu0 %v29, 4
  %v118 = vpop.permute.xlu0 %117
  %119 = vrot.lane.b32.xlu0 %v30, 4
  %v120 = vpop.permute.xlu0 %119
  %vm123 = vcmask 31744
  %v124 = vsel %vm123, %v107, %v118
  %v125 = vsel %vm123, %v112, %v120
  %v126 = vld [vmem:[%s5] sm:$0xff]
  %v127 = vld [vmem:[%s5 + $0x8] sm:$0x1]
  %v128 = vlaneseq
  %v129 = vshrl.u32 %v128, 7
  %v130 = vsub.s32 0, %v129
  %v131 = vrot.slane %v127, %v130
  %vm132 = vcmask 64512
  %v134 = vsel %vm132, %v124, 0
  %v137 = vsel %vm132, %v125, 0
  %139 = vmatprep.subr.mxu0 0.0
  %140 = vmatpush1.msra.mxu0 %v126
  %141 = vmatprep.subr.mxu0 0.0
  %142 = vmatpush1.msra.mxu0 0.0
  %143 = vmatprep.subr.mxu0 0.0
  %144 = vmatpush1.msra.mxu0 0.0
  %145 = vmatprep.subr.mxu0 0.0
  %146 = vmatpush1.msra.mxu0 0.0
  %147 = vmatprep.subr.mxu0 0.0
  %148 = vmatpush1.msra.mxu0 0.0
  %149 = vmatprep.subr.mxu0 0.0
  %150 = vmatpush1.msra.mxu0 0.0
  %151 = vmatprep.subr.mxu0 0.0
  %152 = vmatpush1.msra.mxu0 0.0
  %153 = vmatprep.subr.mxu0 0.0
  %154 = vmatpush1.msra.mxu0 0.0
  %155 = vmatprep.subr.mxu0 0.0
  %156 = vmatpush1.msra.mxu0 0.0
  %157 = vmatprep.subr.mxu0 0.0
  %158 = vmatpush1.msra.mxu0 0.0
  %159 = vmatprep.subr.mxu0 0.0
  %160 = vmatpush1.msra.mxu0 0.0
  %161 = vmatprep.subr.mxu0 0.0
  %162 = vmatpush1.msra.mxu0 0.0
  %163 = vmatprep.subr.mxu0 0.0
  %164 = vmatpush1.msra.mxu0 0.0
  %165 = vmatprep.subr.mxu0 0.0
  %166 = vmatpush1.msra.mxu0 0.0
  %167 = vmatprep.subr.mxu0 0.0
  %168 = vmatpush1.msra.mxu0 0.0
  %169 = vmatprep.subr.mxu0 0.0
  %170 = vmatpush1.msra.mxu0 0.0
  %171 = vmatprep.subr.mxu0 0.0
  %172 = vmatpush1.msra.mxu0 0.0
  %173 = vmatprep.subr.mxu0 0.0
  %174 = vmatpush1.msra.mxu0 0.0
  %175 = vmatprep.subr.mxu0 0.0
  %176 = vmatpush1.msra.mxu0 0.0
  %177 = vmatprep.subr.mxu0 0.0
  %178 = vmatpush1.msra.mxu0 0.0
  %179 = vmatprep.subr.mxu0 0.0
  %180 = vmatpush1.msra.mxu0 0.0
  %181 = vmatprep.subr.mxu0 0.0
  %182 = vmatpush1.msra.mxu0 0.0
  %183 = vmatprep.subr.mxu0 0.0
  %184 = vmatpush1.msra.mxu0 0.0
  %185 = vmatprep.subr.mxu0 0.0
  %186 = vmatpush1.msra.mxu0 0.0
  %187 = vmatprep.subr.mxu0 0.0
  %188 = vmatpush1.msra.mxu0 0.0
  %189 = vmatprep.subr.mxu0 0.0
  %190 = vmatpush1.msra.mxu0 0.0
  %191 = vmatprep.subr.mxu0 0.0
  %192 = vmatpush1.msra.mxu0 0.0
  %193 = vmatprep.subr.mxu0 0.0
  %194 = vmatpush1.msra.mxu0 0.0
  %195 = vmatprep.subr.mxu0 0.0
  %196 = vmatpush1.msra.mxu0 0.0
  %197 = vmatprep.subr.mxu0 0.0
  %198 = vmatpush1.msra.mxu0 0.0
  %199 = vmatprep.subr.mxu0 0.0
  %200 = vmatpush1.msra.mxu0 0.0
  %201 = vmatprep.subr.mxu0 0.0
  %202 = vmatpush1.msra.mxu0 0.0
  %203 = vmatprep.mubr.f32.mxu0 0.0
  %204 = vmatmul.mubr.f32.gmra.mrb[0].mxu0 %v134
  %v205 = vpop.f32.mrb[0].mxu0
  %v206 = vadd.f32 %v131, %v205
  %v207 = vpop.f32.mrb[0].mxu0
  %208 = vmatprep.mubr.f32.mxu0 0.0
  %209 = vmatmul.mubr.f32.gmra.mrb[0].mxu0 %v137
  %v210 = vpop.f32.mrb[0].mxu0
  %v211 = vadd.f32 %v131, %v210
  %v212 = vpop.f32.mrb[0].mxu0
  %213 = vdwg.mxu0
  %v214 = vmax.f32 %v206, 0.0
  %v215 = vmax.f32 %v211, 0.0
  %216 = vmatprep.subr.mxu0 0.0
  %217 = vmatpush1.msra.mxu0 %v214
  %218 = vmatprep.subr.mxu0 0.0
  %219 = vmatpush1.msra.mxu0 %v215
  %220 = vmatprep.subr.mxu0 0.0
  %221 = vmatpush1.msra.mxu0 0.0
  %222 = vmatprep.subr.mxu0 0.0
  %223 = vmatpush1.msra.mxu0 0.0
  %224 = vmatprep.subr.mxu0 0.0
  %225 = vmatpush1.msra.mxu0 0.0
  %226 = vmatprep.subr.mxu0 0.0
  %227 = vmatpush1.msra.mxu0 0.0
  %228 = vmatprep.subr.mxu0 0.0
  %229 = vmatpush1.msra.mxu0 0.0
  %230 = vmatprep.subr.mxu0 0.0
  %231 = vmatpush1.msra.mxu0 0.0
  %232 = vmatprep.subr.mxu0 0.0
  %233 = vmatpush1.msra.mxu0 0.0
  %234 = vmatprep.subr.mxu0 0.0
  %235 = vmatpush1.msra.mxu0 0.0
  %236 = vmatprep.subr.mxu0 0.0
  %237 = vmatpush1.msra.mxu0 0.0
  %238 = vmatprep.subr.mxu0 0.0
  %239 = vmatpush1.msra.mxu0 0.0
  %240 = vmatprep.subr.mxu0 0.0
  %241 = vmatpush1.msra.mxu0 0.0
  %242 = vmatprep.subr.mxu0 0.0
  %243 = vmatpush1.msra.mxu0 0.0
  %244 = vmatprep.subr.mxu0 0.0
  %245 = vmatpush1.msra.mxu0 0.0
  %246 = vmatprep.subr.mxu0 0.0
  %247 = vmatpush1.msra.mxu0 0.0
  %248 = vmatprep.subr.mxu0 0.0
  %249 = vmatpush1.msra.mxu0 0.0
  %250 = vmatprep.subr.mxu0 0.0
  %251 = vmatpush1.msra.mxu0 0.0
  %252 = vmatprep.subr.mxu0 0.0
  %253 = vmatpush1.msra.mxu0 0.0
  %254 = vmatprep.subr.mxu0 0.0
  %255 = vmatpush1.msra.mxu0 0.0
  %256 = vmatprep.subr.mxu0 0.0
  %257 = vmatpush1.msra.mxu0 0.0
  %258 = vmatprep.subr.mxu0 0.0
  %259 = vmatpush1.msra.mxu0 0.0
  %260 = vmatprep.subr.mxu0 0.0
  %261 = vmatpush1.msra.mxu0 0.0
  %262 = vmatprep.subr.mxu0 0.0
  %263 = vmatpush1.msra.mxu0 0.0
  %264 = vmatprep.subr.mxu0 0.0
  %265 = vmatpush1.msra.mxu0 0.0
  %266 = vmatprep.subr.mxu0 0.0
  %267 = vmatpush1.msra.mxu0 0.0
  %268 = vmatprep.subr.mxu0 0.0
  %269 = vmatpush1.msra.mxu0 0.0
  %270 = vmatprep.subr.mxu0 0.0
  %271 = vmatpush1.msra.mxu0 0.0
  %272 = vmatprep.subr.mxu0 0.0
  %273 = vmatpush1.msra.mxu0 0.0
  %274 = vmatprep.subr.mxu0 0.0
  %275 = vmatpush1.msra.mxu0 0.0
  %276 = vmatprep.subr.mxu0 0.0
  %277 = vmatpush1.msra.mxu0 0.0
  %278 = vmatprep.subr.mxu0 0.0
  %279 = vmatpush1.msra.mxu0 0.0
  %280 = vmatprep.mubr.f32.mxu0 0.0
  %281 = vmatmul.mubr.f32.gmra.mrb[0].mxu0 %v35
  %v282 = vpop.f32.mrb[0].mxu0
  %v283 = vadd.f32 0.0, %v282
  %v284 = vpop.f32.mrb[0].mxu0
  %285 = vmatprep.mubr.f32.mxu0 0.0
  %286 = vmatmul.mubr.f32.gmra.mrb[0].mxu0 %v38
  %v287 = vpop.f32.mrb[0].mxu0
  %v288 = vadd.f32 0.0, %v287
  %v289 = vpop.f32.mrb[0].mxu0
  %290 = vdwg.mxu0
  %293 = vrot.lane.b32.xlu0 %v214, 32
  %v294 = vpop.permute.xlu0 %293
  %295 = vrot.lane.b32.xlu0 %v215, 32
  %v296 = vpop.permute.xlu0 %295
  %vm299 = vcmask 261120
  %v300 = vsel %vm299, %v283, %v294
  %v301 = vsel %vm299, %v288, %v296
  %v302 = vld [vmem:[%s5 + $0x10] sm:$0xff]
  %v303 = vld [vmem:[%s5 + $0x18] sm:$0xff]
  %v304 = vld [vmem:[%s5 + $0x20] sm:$0xff]
  %v305 = vld [vmem:[%s5 + $0x28] sm:$0xff]
  %v306 = vld [vmem:[%s5 + $0x30] sm:$0xff]
  %v307 = vld [vmem:[%s5 + $0x38] sm:$0xff]
  %v308 = vld [vmem:[%s5 + $0x40] sm:$0xff]
  %v309 = vld [vmem:[%s5 + $0x48] sm:$0xff]
  %v310 = vld [vmem:[%s5 + $0x50] sm:$0x1]
  %v311 = vlaneseq
  %v312 = vshrl.u32 %v311, 7
  %v313 = vsub.s32 0, %v312
  %v314 = vrot.slane %v310, %v313
  %vm315 = vcmask 523264
  %v317 = vsel %vm315, %v300, 0
  %v320 = vsel %vm315, %v301, 0
  %322 = vmatprep.subr.mxu0 0.0
  %323 = vmatpush1.msra.mxu0 %v302
  %324 = vmatprep.subr.mxu0 0.0
  %325 = vmatpush1.msra.mxu0 %v303
  %326 = vmatprep.subr.mxu0 0.0
  %327 = vmatpush1.msra.mxu0 %v304
  %328 = vmatprep.subr.mxu0 0.0
  %329 = vmatpush1.msra.mxu0 %v305
  %330 = vmatprep.subr.mxu0 0.0
  %331 = vmatpush1.msra.mxu0 %v306
  %332 = vmatprep.subr.mxu0 0.0
  %333 = vmatpush1.msra.mxu0 %v307
  %334 = vmatprep.subr.mxu0 0.0
  %335 = vmatpush1.msra.mxu0 %v308
  %336 = vmatprep.subr.mxu0 0.0
  %337 = vmatpush1.msra.mxu0 %v309
  %338 = vmatprep.subr.mxu0 0.0
  %339 = vmatpush1.msra.mxu0 0.0
  %340 = vmatprep.subr.mxu0 0.0
  %341 = vmatpush1.msra.mxu0 0.0
  %342 = vmatprep.subr.mxu0 0.0
  %343 = vmatpush1.msra.mxu0 0.0
  %344 = vmatprep.subr.mxu0 0.0
  %345 = vmatpush1.msra.mxu0 0.0
  %346 = vmatprep.subr.mxu0 0.0
  %347 = vmatpush1.msra.mxu0 0.0
  %348 = vmatprep.subr.mxu0 0.0
  %349 = vmatpush1.msra.mxu0 0.0
  %350 = vmatprep.subr.mxu0 0.0
  %351 = vmatpush1.msra.mxu0 0.0
  %352 = vmatprep.subr.mxu0 0.0
  %353 = vmatpush1.msra.mxu0 0.0
  %354 = vmatprep.subr.mxu0 0.0
  %355 = vmatpush1.msra.mxu0 0.0
  %356 = vmatprep.subr.mxu0 0.0
  %357 = vmatpush1.msra.mxu0 0.0
  %358 = vmatprep.subr.mxu0 0.0
  %359 = vmatpush1.msra.mxu0 0.0
  %360 = vmatprep.subr.mxu0 0.0
  %361 = vmatpush1.msra.mxu0 0.0
  %362 = vmatprep.subr.mxu0 0.0
  %363 = vmatpush1.msra.mxu0 0.0
  %364 = vmatprep.subr.mxu0 0.0
  %365 = vmatpush1.msra.mxu0 0.0
  %366 = vmatprep.subr.mxu0 0.0
  %367 = vmatpush1.msra.mxu0 0.0
  %368 = vmatprep.subr.mxu0 0.0
  %369 = vmatpush1.msra.mxu0 0.0
  %370 = vmatprep.subr.mxu0 0.0
  %371 = vmatpush1.msra.mxu0 0.0
  %372 = vmatprep.subr.mxu0 0.0
  %373 = vmatpush1.msra.mxu0 0.0
  %374 = vmatprep.subr.mxu0 0.0
  %375 = vmatpush1.msra.mxu0 0.0
  %376 = vmatprep.subr.mxu0 0.0
  %377 = vmatpush1.msra.mxu0 0.0
  %378 = vmatprep.subr.mxu0 0.0
  %379 = vmatpush1.msra.mxu0 0.0
  %380 = vmatprep.subr.mxu0 0.0
  %381 = vmatpush1.msra.mxu0 0.0
  %382 = vmatprep.subr.mxu0 0.0
  %383 = vmatpush1.msra.mxu0 0.0
  %384 = vmatprep.subr.mxu0 0.0
  %385 = vmatpush1.msra.mxu0 0.0
  %386 = vmatprep.mubr.f32.mxu0 0.0
  %387 = vmatmul.mubr.f32.gmra.mrb[0].mxu0 %v317
  %v388 = vpop.f32.mrb[0].mxu0
  %v389 = vadd.f32 %v314, %v388
  %v390 = vpop.f32.mrb[0].mxu0
  %391 = vmatprep.mubr.f32.mxu0 0.0
  %392 = vmatmul.mubr.f32.gmra.mrb[0].mxu0 %v320
  %v393 = vpop.f32.mrb[0].mxu0
  %v394 = vadd.f32 %v314, %v393
  %v395 = vpop.f32.mrb[0].mxu0
  %396 = vdwg.mxu0
  %v397 = vmax.f32 %v389, 0.0
  %v398 = vmax.f32 %v394, 0.0
  %v399 = vld [vmem:[%s2] sm:$0xff]
  %v400 = vld [vmem:[%s2 + $0x8] sm:$0xff]
  %v401 = vld [vmem:[%s6] sm:$0xff]
  %v402 = vld [vmem:[%s6 + $0x8] sm:$0xff]
  %v403 = vld [vmem:[%s6 + $0x10] sm:$0xff]
  %v404 = vld [vmem:[%s6 + $0x18] sm:$0xff]
  %v405 = vld [vmem:[%s6 + $0x20] sm:$0xff]
  %v406 = vld [vmem:[%s6 + $0x28] sm:$0xff]
  %v407 = vld [vmem:[%s6 + $0x30] sm:$0xff]
  %v408 = vld [vmem:[%s6 + $0x38] sm:$0xff]
  %v409 = vld [vmem:[%s6 + $0x40] sm:$0xff]
  %v410 = vld [vmem:[%s6 + $0x48] sm:$0xff]
  %v411 = vld [vmem:[%s6 + $0x50] sm:$0xff]
  %v412 = vld [vmem:[%s6 + $0x58] sm:$0xff]
  %v413 = vld [vmem:[%s6 + $0x60] sm:$0xff]
  %v414 = vld [vmem:[%s6 + $0x68] sm:$0xff]
  %v415 = vld [vmem:[%s6 + $0x70] sm:$0xff]
  %v416 = vld [vmem:[%s6 + $0x78] sm:$0xff]
  %s417 = scalar_lea.vmem %s6, 192
  %v418 = vld [vmem:[%s417] ss:$8 sm:$0xf]
  %v420 = vlaneseq
  %v421 = vshrl.u32 %v420, 7
  %v422 = vsub.s32 0, %v421
  %v423 = vrot.slane %v418, %v422
  %v424 = vlaneseq
  %v425 = vshrl.u32 %v424, 7
  %v426 = vsub.s32 1, %v425
  %v427 = vrot.slane %v418, %v426
  %v428 = vlaneseq
  %v429 = vshrl.u32 %v428, 7
  %v430 = vsub.s32 2, %v429
  %v431 = vrot.slane %v418, %v430
  %v432 = vlaneseq
  %v433 = vshrl.u32 %v432, 7
  %v434 = vsub.s32 3, %v433
  %v435 = vrot.slane %v418, %v434
  %v441 = vsel %vm299, %v399, 0
  %v444 = vsel %vm299, %v400, 0
  %446 = vmatprep.subr.mxu0 %v402
  %447 = vmatpush1.msra.mxu0 %v401
  %448 = vmatprep.subr.mxu0 %v406
  %449 = vmatpush1.msra.mxu0 %v405
  %450 = vmatprep.subr.mxu0 %v410
  %451 = vmatpush1.msra.mxu0 %v409
  %452 = vmatprep.subr.mxu0 %v414
  %453 = vmatpush1.msra.mxu0 %v413
  %454 = vmatprep.subr.mxu0 0.0
  %455 = vmatpush1.msra.mxu0 0.0
  %456 = vmatprep.subr.mxu0 0.0
  %457 = vmatpush1.msra.mxu0 0.0
  %458 = vmatprep.subr.mxu0 0.0
  %459 = vmatpush1.msra.mxu0 0.0
  %460 = vmatprep.subr.mxu0 0.0
  %461 = vmatpush1.msra.mxu0 0.0
  %462 = vmatprep.subr.mxu0 0.0
  %463 = vmatpush1.msra.mxu0 0.0
  %464 = vmatprep.subr.mxu0 0.0
  %465 = vmatpush1.msra.mxu0 0.0
  %466 = vmatprep.subr.mxu0 0.0
  %467 = vmatpush1.msra.mxu0 0.0
  %468 = vmatprep.subr.mxu0 0.0
  %469 = vmatpush1.msra.mxu0 0.0
  %470 = vmatprep.subr.mxu0 0.0
  %471 = vmatpush1.msra.mxu0 0.0
  %472 = vmatprep.subr.mxu0 0.0
  %473 = vmatpush1.msra.mxu0 0.0
  %474 = vmatprep.subr.mxu0 0.0
  %475 = vmatpush1.msra.mxu0 0.0
  %476 = vmatprep.subr.mxu0 0.0
  %477 = vmatpush1.msra.mxu0 0.0
  %478 = vmatprep.subr.mxu0 0.0
  %479 = vmatpush1.msra.mxu0 0.0
  %480 = vmatprep.subr.mxu0 0.0
  %481 = vmatpush1.msra.mxu0 0.0
  %482 = vmatprep.subr.mxu0 0.0
  %483 = vmatpush1.msra.mxu0 0.0
  %484 = vmatprep.subr.mxu0 0.0
  %485 = vmatpush1.msra.mxu0 0.0
  %486 = vmatprep.subr.mxu0 0.0
  %487 = vmatpush1.msra.mxu0 0.0
  %488 = vmatprep.subr.mxu0 0.0
  %489 = vmatpush1.msra.mxu0 0.0
  %490 = vmatprep.subr.mxu0 0.0
  %491 = vmatpush1.msra.mxu0 0.0
  %492 = vmatprep.subr.mxu0 0.0
  %493 = vmatpush1.msra.mxu0 0.0
  %494 = vmatprep.subr.mxu0 0.0
  %495 = vmatpush1.msra.mxu0 0.0
  %496 = vmatprep.subr.mxu0 0.0
  %497 = vmatpush1.msra.mxu0 0.0
  %498 = vmatprep.subr.mxu0 0.0
  %499 = vmatpush1.msra.mxu0 0.0
  %500 = vmatprep.subr.mxu0 0.0
  %501 = vmatpush1.msra.mxu0 0.0
  %502 = vmatprep.subr.mxu0 0.0
  %503 = vmatpush1.msra.mxu0 0.0
  %504 = vmatprep.subr.mxu0 0.0
  %505 = vmatpush1.msra.mxu0 0.0
  %506 = vmatprep.subr.mxu0 0.0
  %507 = vmatpush1.msra.mxu0 0.0
  %508 = vmatprep.subr.mxu0 0.0
  %509 = vmatpush1.msra.mxu0 0.0
  %510 = vmatprep.mubr.f32.mxu0 0.0
  %511 = vmatmul.mubr.f32.gmra.mrb[0].mxu0 %v441
  %v512 = vpop.f32.mrb[0].mxu0
  %v513 = vadd.f32 %v423, %v512
  %v514 = vpop.f32.mrb[0].mxu0
  %v515 = vadd.f32 %v427, %v514
  %516 = vmatprep.mubr.f32.mxu0 0.0
  %517 = vmatmul.mubr.f32.gmra.mrb[0].mxu0 %v444
  %v518 = vpop.f32.mrb[0].mxu0
  %v519 = vadd.f32 %v423, %v518
  %v520 = vpop.f32.mrb[0].mxu0
  %v521 = vadd.f32 %v427, %v520
  %522 = vdwg.mxu0
  %523 = vmatprep.subr.mxu0 %v404
  %524 = vmatpush1.msra.mxu0 %v403
  %525 = vmatprep.subr.mxu0 %v408
  %526 = vmatpush1.msra.mxu0 %v407
  %527 = vmatprep.subr.mxu0 %v412
  %528 = vmatpush1.msra.mxu0 %v411
  %529 = vmatprep.subr.mxu0 %v416
  %530 = vmatpush1.msra.mxu0 %v415
  %531 = vmatprep.subr.mxu0 0.0
  %532 = vmatpush1.msra.mxu0 0.0
  %533 = vmatprep.subr.mxu0 0.0
  %534 = vmatpush1.msra.mxu0 0.0
  %535 = vmatprep.subr.mxu0 0.0
  %536 = vmatpush1.msra.mxu0 0.0
  %537 = vmatprep.subr.mxu0 0.0
  %538 = vmatpush1.msra.mxu0 0.0
  %539 = vmatprep.subr.mxu0 0.0
  %540 = vmatpush1.msra.mxu0 0.0
  %541 = vmatprep.subr.mxu0 0.0
  %542 = vmatpush1.msra.mxu0 0.0
  %543 = vmatprep.subr.mxu0 0.0
  %544 = vmatpush1.msra.mxu0 0.0
  %545 = vmatprep.subr.mxu0 0.0
  %546 = vmatpush1.msra.mxu0 0.0
  %547 = vmatprep.subr.mxu0 0.0
  %548 = vmatpush1.msra.mxu0 0.0
  %549 = vmatprep.subr.mxu0 0.0
  %550 = vmatpush1.msra.mxu0 0.0
  %551 = vmatprep.subr.mxu0 0.0
  %552 = vmatpush1.msra.mxu0 0.0
  %553 = vmatprep.subr.mxu0 0.0
  %554 = vmatpush1.msra.mxu0 0.0
  %555 = vmatprep.subr.mxu0 0.0
  %556 = vmatpush1.msra.mxu0 0.0
  %557 = vmatprep.subr.mxu0 0.0
  %558 = vmatpush1.msra.mxu0 0.0
  %559 = vmatprep.subr.mxu0 0.0
  %560 = vmatpush1.msra.mxu0 0.0
  %561 = vmatprep.subr.mxu0 0.0
  %562 = vmatpush1.msra.mxu0 0.0
  %563 = vmatprep.subr.mxu0 0.0
  %564 = vmatpush1.msra.mxu0 0.0
  %565 = vmatprep.subr.mxu0 0.0
  %566 = vmatpush1.msra.mxu0 0.0
  %567 = vmatprep.subr.mxu0 0.0
  %568 = vmatpush1.msra.mxu0 0.0
  %569 = vmatprep.subr.mxu0 0.0
  %570 = vmatpush1.msra.mxu0 0.0
  %571 = vmatprep.subr.mxu0 0.0
  %572 = vmatpush1.msra.mxu0 0.0
  %573 = vmatprep.subr.mxu0 0.0
  %574 = vmatpush1.msra.mxu0 0.0
  %575 = vmatprep.subr.mxu0 0.0
  %576 = vmatpush1.msra.mxu0 0.0
  %577 = vmatprep.subr.mxu0 0.0
  %578 = vmatpush1.msra.mxu0 0.0
  %579 = vmatprep.subr.mxu0 0.0
  %580 = vmatpush1.msra.mxu0 0.0
  %581 = vmatprep.subr.mxu0 0.0
  %582 = vmatpush1.msra.mxu0 0.0
  %583 = vmatprep.subr.mxu0 0.0
  %584 = vmatpush1.msra.mxu0 0.0
  %585 = vmatprep.subr.mxu0 0.0
  %586 = vmatpush1.msra.mxu0 0.0
  %587 = vmatprep.mubr.f32.mxu0 0.0
  %588 = vmatmul.mubr.f32.gmra.mrb[0].mxu0 %v441
  %v589 = vpop.f32.mrb[0].mxu0
  %v590 = vadd.f32 %v431, %v589
  %v591 = vpop.f32.mrb[0].mxu0
  %v592 = vadd.f32 %v435, %v591
  %593 = vmatprep.mubr.f32.mxu0 0.0
  %594 = vmatmul.mubr.f32.gmra.mrb[0].mxu0 %v444
  %v595 = vpop.f32.mrb[0].mxu0
  %v596 = vadd.f32 %v431, %v595
  %v597 = vpop.f32.mrb[0].mxu0
  %v598 = vadd.f32 %v435, %v597
  %599 = vdwg.mxu0
  %v600 = vld [vmem:[%s6 + $0x80] sm:$0xff]
  %v601 = vld [vmem:[%s6 + $0xa0] sm:$0xff]
  %v603 = vsel %vm33, 0.0, 0
  %605 = vmatprep.subr.mxu0 0.0
  %606 = vmatpush1.msra.mxu0 %v600
  %607 = vmatprep.subr.mxu0 0.0
  %608 = vmatpush1.msra.mxu0 %v601
  %609 = vmatprep.subr.mxu0 0.0
  %610 = vmatpush1.msra.mxu0 0.0
  %611 = vmatprep.subr.mxu0 0.0
  %612 = vmatpush1.msra.mxu0 0.0
  %613 = vmatprep.subr.mxu0 0.0
  %614 = vmatpush1.msra.mxu0 0.0
  %615 = vmatprep.subr.mxu0 0.0
  %616 = vmatpush1.msra.mxu0 0.0
  %617 = vmatprep.subr.mxu0 0.0
  %618 = vmatpush1.msra.mxu0 0.0
  %619 = vmatprep.subr.mxu0 0.0
  %620 = vmatpush1.msra.mxu0 0.0
  %621 = vmatprep.subr.mxu0 0.0
  %622 = vmatpush1.msra.mxu0 0.0
  %623 = vmatprep.subr.mxu0 0.0
  %624 = vmatpush1.msra.mxu0 0.0
  %625 = vmatprep.subr.mxu0 0.0
  %626 = vmatpush1.msra.mxu0 0.0
  %627 = vmatprep.subr.mxu0 0.0
  %628 = vmatpush1.msra.mxu0 0.0
  %629 = vmatprep.subr.mxu0 0.0
  %630 = vmatpush1.msra.mxu0 0.0
  %631 = vmatprep.subr.mxu0 0.0
  %632 = vmatpush1.msra.mxu0 0.0
  %633 = vmatprep.subr.mxu0 0.0
  %634 = vmatpush1.msra.mxu0 0.0
  %635 = vmatprep.subr.mxu0 0.0
  %636 = vmatpush1.msra.mxu0 0.0
  %637 = vmatprep.subr.mxu0 0.0
  %638 = vmatpush1.msra.mxu0 0.0
  %639 = vmatprep.subr.mxu0 0.0
  %640 = vmatpush1.msra.mxu0 0.0
  %641 = vmatprep.subr.mxu0 0.0
  %642 = vmatpush1.msra.mxu0 0.0
  %643 = vmatprep.subr.mxu0 0.0
  %644 = vmatpush1.msra.mxu0 0.0
  %645 = vmatprep.subr.mxu0 0.0
  %646 = vmatpush1.msra.mxu0 0.0
  %647 = vmatprep.subr.mxu0 0.0
  %648 = vmatpush1.msra.mxu0 0.0
  %649 = vmatprep.subr.mxu0 0.0
  %650 = vmatpush1.msra.mxu0 0.0
  %651 = vmatprep.subr.mxu0 0.0
  %652 = vmatpush1.msra.mxu0 0.0
  %653 = vmatprep.subr.mxu0 0.0
  %654 = vmatpush1.msra.mxu0 0.0
  %655 = vmatprep.subr.mxu0 0.0
  %656 = vmatpush1.msra.mxu0 0.0
  %657 = vmatprep.subr.mxu0 0.0
  %658 = vmatpush1.msra.mxu0 0.0
  %659 = vmatprep.subr.mxu0 0.0
  %660 = vmatpush1.msra.mxu0 0.0
  %661 = vmatprep.subr.mxu0 0.0
  %662 = vmatpush1.msra.mxu0 0.0
  %663 = vmatprep.subr.mxu0 0.0
  %664 = vmatpush1.msra.mxu0 0.0
  %665 = vmatprep.subr.mxu0 0.0
  %666 = vmatpush1.msra.mxu0 0.0
  %667 = vmatprep.subr.mxu0 0.0
  %668 = vmatpush1.msra.mxu0 0.0
  %669 = vmatprep.mubr.f32.mxu0 0.0
  %670 = vmatmul.mubr.f32.gmra.mrb[0].mxu0 %v603
  %v671 = vpop.f32.mrb[0].mxu0
  %v672 = vadd.f32 0.0, %v671
  %v673 = vpop.f32.mrb[0].mxu0
  %674 = vmatprep.mubr.f32.mxu0 0.0
  %675 = vmatmul.mubr.f32.gmra.mrb[0].mxu0 %v603
  %v676 = vpop.f32.mrb[0].mxu0
  %v677 = vadd.f32 0.0, %v676
  %v678 = vpop.f32.mrb[0].mxu0
  %679 = vdwg.mxu0
  %v680 = vadd.f32 %v513, %v672
  %v681 = vadd.f32 %v519, %v677
  %v682 = vxor.u32 %v680, 2147483648
  %v683 = vxor.u32 %v681, 2147483648
  %v684 = vmul.f32 %v682, 1.442695
  %v685 = vpow.pop %v684
  %v686 = vmul.f32 %v683, 1.442695
  %v687 = vpow.pop %v686
  %v688 = vadd.f32 %v685, 1.0
  %v689 = vadd.f32 %v687, 1.0
  %v690 = vrcp.pop %v688
  %v691 = vmul.f32 1.0, %v690
  %v692 = vrcp.pop %v689
  %v693 = vmul.f32 1.0, %v692
  %v694 = vmul.f32 %v691, 0.0
  %v695 = vmul.f32 %v693, 0.0
  %v696 = vtanh.pop %v680
  %v697 = vtanh.pop %v681
  %700 = vrot.lane.b32.xlu0 %v696, 80
  %v701 = vpop.permute.xlu0 %700
  %702 = vrot.lane.b32.xlu0 %v697, 80
  %v703 = vpop.permute.xlu0 %702
  %v706 = vmul.f32 %v691, %v701
  %v707 = vmul.f32 %v693, %v703
  %710 = vrot.lane.b32.xlu0 %v706, 16
  %v711 = vpop.permute.xlu0 %710
  %712 = vrot.lane.b32.xlu0 %v707, 16
  %v713 = vpop.permute.xlu0 %712
  %v716 = vadd.f32 %v694, %v711
  %v717 = vadd.f32 %v695, %v713
  %v718 = vtanh.pop %v716
  %v719 = vtanh.pop %v717
  %722 = vrot.lane.b32.xlu0 %v718, 16
  %v723 = vpop.permute.xlu0 %722
  %724 = vrot.lane.b32.xlu0 %v719, 16
  %v725 = vpop.permute.xlu0 %724
  %v728 = vmul.f32 %v691, %v723
  %v729 = vmul.f32 %v693, %v725
  %732 = vrot.lane.b32.xlu0 %v728, 96
  %v733 = vpop.permute.xlu0 %732
  %734 = vrot.lane.b32.xlu0 %v729, 96
  %v735 = vpop.permute.xlu0 %734
  %v736 = vsel %vm33, %v733, 0
  %v738 = vsel %vm33, %v735, 0
  %740 = vmatprep.subr.mxu0 0.0
  %741 = vmatpush1.msra.mxu0 %v600
  %742 = vmatprep.subr.mxu0 0.0
  %743 = vmatpush1.msra.mxu0 %v601
  %744 = vmatprep.subr.mxu0 0.0
  %745 = vmatpush1.msra.mxu0 0.0
  %746 = vmatprep.subr.mxu0 0.0
  %747 = vmatpush1.msra.mxu0 0.0
  %748 = vmatprep.subr.mxu0 0.0
  %749 = vmatpush1.msra.mxu0 0.0
  %750 = vmatprep.subr.mxu0 0.0
  %751 = vmatpush1.msra.mxu0 0.0
  %752 = vmatprep.subr.mxu0 0.0
  %753 = vmatpush1.msra.mxu0 0.0
  %754 = vmatprep.subr.mxu0 0.0
  %755 = vmatpush1.msra.mxu0 0.0
  %756 = vmatprep.subr.mxu0 0.0
  %757 = vmatpush1.msra.mxu0 0.0
  %758 = vmatprep.subr.mxu0 0.0
  %759 = vmatpush1.msra.mxu0 0.0
  %760 = vmatprep.subr.mxu0 0.0
  %761 = vmatpush1.msra.mxu0 0.0
  %762 = vmatprep.subr.mxu0 0.0
  %763 = vmatpush1.msra.mxu0 0.0
  %764 = vmatprep.subr.mxu0 0.0
  %765 = vmatpush1.msra.mxu0 0.0
  %766 = vmatprep.subr.mxu0 0.0
  %767 = vmatpush1.msra.mxu0 0.0
  %768 = vmatprep.subr.mxu0 0.0
  %769 = vmatpush1.msra.mxu0 0.0
  %770 = vmatprep.subr.mxu0 0.0
  %771 = vmatpush1.msra.mxu0 0.0
  %772 = vmatprep.subr.mxu0 0.0
  %773 = vmatpush1.msra.mxu0 0.0
  %774 = vmatprep.subr.mxu0 0.0
  %775 = vmatpush1.msra.mxu0 0.0
  %776 = vmatprep.subr.mxu0 0.0
  %777 = vmatpush1.msra.mxu0 0.0
  %778 = vmatprep.subr.mxu0 0.0
  %779 = vmatpush1.msra.mxu0 0.0
  %780 = vmatprep.subr.mxu0 0.0
  %781 = vmatpush1.msra.mxu0 0.0
  %782 = vmatprep.subr.mxu0 0.0
  %783 = vmatpush1.msra.mxu0 0.0
  %784 = vmatprep.subr.mxu0 0.0
  %785 = vmatpush1.msra.mxu0 0.0
  %786 = vmatprep.subr.mxu0 0.0
  %787 = vmatpush1.msra.mxu0 0.0
  %788 = vmatprep.subr.mxu0 0.0
  %789 = vmatpush1.msra.mxu0 0.0
  %790 = vmatprep.subr.mxu0 0.0
  %791 = vmatpush1.msra.mxu0 0.0
  %792 = vmatprep.subr.mxu0 0.0
  %793 = vmatpush1.msra.mxu0 0.0
  %794 = vmatprep.subr.mxu0 0.0
  %795 = vmatpush1.msra.mxu0 0.0
  %796 = vmatprep.subr.mxu0 0.0
  %797 = vmatpush1.msra.mxu0 0.0
  %798 = vmatprep.subr.mxu0 0.0
  %799 = vmatpush1.msra.mxu0 0.0
  %800 = vmatprep.subr.mxu0 0.0
  %801 = vmatpush1.msra.mxu0 0.0
  %802 = vmatprep.subr.mxu0 0.0
  %803 = vmatpush1.msra.mxu0 0.0
  %804 = vmatprep.mubr.f32.mxu0 0.0
  %805 = vmatmul.mubr.f32.gmra.mrb[0].mxu0 %v736
  %v806 = vpop.f32.mrb[0].mxu0
  %v807 = vadd.f32 0.0, %v806
  %v808 = vpop.f32.mrb[0].mxu0
  %809 = vmatprep.mubr.f32.mxu0 0.0
  %810 = vmatmul.mubr.f32.gmra.mrb[0].mxu0 %v738
  %v811 = vpop.f32.mrb[0].mxu0
  %v812 = vadd.f32 0.0, %v811
  %v813 = vpop.f32.mrb[0].mxu0
  %814 = vdwg.mxu0
  %817 = vrot.lane.b32.xlu0 %v807, 64
  %v818 = vpop.permute.xlu0 %817
  %819 = vrot.lane.b32.xlu0 %v812, 64
  %v820 = vpop.permute.xlu0 %819
  %v823 = vadd.f32 %v513, %v818
  %v824 = vadd.f32 %v519, %v820
  %v825 = vxor.u32 %v823, 2147483648
  %v826 = vxor.u32 %v824, 2147483648
  %v827 = vmul.f32 %v825, 1.442695
  %v828 = vpow.pop %v827
  %v829 = vmul.f32 %v826, 1.442695
  %v830 = vpow.pop %v829
  %v831 = vadd.f32 %v828, 1.0
  %v832 = vadd.f32 %v830, 1.0
  %v833 = vrcp.pop %v831
  %v834 = vmul.f32 1.0, %v833
  %v835 = vrcp.pop %v832
  %v836 = vmul.f32 1.0, %v835
  %839 = vrot.lane.b32.xlu0 %v716, 64
  %v840 = vpop.permute.xlu0 %839
  %841 = vrot.lane.b32.xlu0 %v717, 64
  %v842 = vpop.permute.xlu0 %841
  %v845 = vmul.f32 %v834, %v840
  %v846 = vmul.f32 %v836, %v842
  %v847 = vtanh.pop %v823
  %v848 = vtanh.pop %v824
  %851 = vrot.lane.b32.xlu0 %v847, 80
  %v852 = vpop.permute.xlu0 %851
  %853 = vrot.lane.b32.xlu0 %v848, 80
  %v854 = vpop.permute.xlu0 %853
  %v857 = vmul.f32 %v834, %v852
  %v858 = vmul.f32 %v836, %v854
  %861 = vrot.lane.b32.xlu0 %v857, 16
  %v862 = vpop.permute.xlu0 %861
  %863 = vrot.lane.b32.xlu0 %v858, 16
  %v864 = vpop.permute.xlu0 %863
  %v867 = vadd.f32 %v845, %v862
  %v868 = vadd.f32 %v846, %v864
  %v869 = vtanh.pop %v867
  %v870 = vtanh.pop %v868
  %873 = vrot.lane.b32.xlu0 %v869, 16
  %v874 = vpop.permute.xlu0 %873
  %875 = vrot.lane.b32.xlu0 %v870, 16
  %v876 = vpop.permute.xlu0 %875
  %v879 = vmul.f32 %v834, %v874
  %v880 = vmul.f32 %v836, %v876
  %883 = vrot.lane.b32.xlu0 %v879, 32
  %v884 = vpop.permute.xlu0 %883
  %885 = vrot.lane.b32.xlu0 %v880, 32
  %v886 = vpop.permute.xlu0 %885
  %v887 = vsel %vm33, %v884, 0
  %v889 = vsel %vm33, %v886, 0
  %891 = vmatprep.subr.mxu0 0.0
  %892 = vmatpush1.msra.mxu0 %v600
  %893 = vmatprep.subr.mxu0 0.0
  %894 = vmatpush1.msra.mxu0 %v601
  %895 = vmatprep.subr.mxu0 0.0
  %896 = vmatpush1.msra.mxu0 0.0
  %897 = vmatprep.subr.mxu0 0.0
  %898 = vmatpush1.msra.mxu0 0.0
  %899 = vmatprep.subr.mxu0 0.0
  %900 = vmatpush1.msra.mxu0 0.0
  %901 = vmatprep.subr.mxu0 0.0
  %902 = vmatpush1.msra.mxu0 0.0
  %903 = vmatprep.subr.mxu0 0.0
  %904 = vmatpush1.msra.mxu0 0.0
  %905 = vmatprep.subr.mxu0 0.0
  %906 = vmatpush1.msra.mxu0 0.0
  %907 = vmatprep.subr.mxu0 0.0
  %908 = vmatpush1.msra.mxu0 0.0
  %909 = vmatprep.subr.mxu0 0.0
  %910 = vmatpush1.msra.mxu0 0.0
  %911 = vmatprep.subr.mxu0 0.0
  %912 = vmatpush1.msra.mxu0 0.0
  %913 = vmatprep.subr.mxu0 0.0
  %914 = vmatpush1.msra.mxu0 0.0
  %915 = vmatprep.subr.mxu0 0.0
  %916 = vmatpush1.msra.mxu0 0.0
  %917 = vmatprep.subr.mxu0 0.0
  %918 = vmatpush1.msra.mxu0 0.0
  %919 = vmatprep.subr.mxu0 0.0
  %920 = vmatpush1.msra.mxu0 0.0
  %921 = vmatprep.subr.mxu0 0.0
  %922 = vmatpush1.msra.mxu0 0.0
  %923 = vmatprep.subr.mxu0 0.0
  %924 = vmatpush1.msra.mxu0 0.0
  %925 = vmatprep.subr.mxu0 0.0
  %926 = vmatpush1.msra.mxu0 0.0
  %927 = vmatprep.subr.mxu0 0.0
  %928 = vmatpush1.msra.mxu0 0.0
  %929 = vmatprep.subr.mxu0 0.0
  %930 = vmatpush1.msra.mxu0 0.0
  %931 = vmatprep.subr.mxu0 0.0
  %932 = vmatpush1.msra.mxu0 0.0
  %933 = vmatprep.subr.mxu0 0.0
  %934 = vmatpush1.msra.mxu0 0.0
  %935 = vmatprep.subr.mxu0 0.0
  %936 = vmatpush1.msra.mxu0 0.0
  %937 = vmatprep.subr.mxu0 0.0
  %938 = vmatpush1.msra.mxu0 0.0
  %939 = vmatprep.subr.mxu0 0.0
  %940 = vmatpush1.msra.mxu0 0.0
  %941 = vmatprep.subr.mxu0 0.0
  %942 = vmatpush1.msra.mxu0 0.0
  %943 = vmatprep.subr.mxu0 0.0
  %944 = vmatpush1.msra.mxu0 0.0
  %945 = vmatprep.subr.mxu0 0.0
  %946 = vmatpush1.msra.mxu0 0.0
  %947 = vmatprep.subr.mxu0 0.0
  %948 = vmatpush1.msra.mxu0 0.0
  %949 = vmatprep.subr.mxu0 0.0
  %950 = vmatpush1.msra.mxu0 0.0
  %951 = vmatprep.subr.mxu0 0.0
  %952 = vmatpush1.msra.mxu0 0.0
  %953 = vmatprep.subr.mxu0 0.0
  %954 = vmatpush1.msra.mxu0 0.0
  %955 = vmatprep.mubr.f32.mxu0 0.0
  %956 = vmatmul.mubr.f32.gmra.mrb[0].mxu0 %v887
  %v957 = vpop.f32.mrb[0].mxu0
  %v958 = vadd.f32 0.0, %v957
  %v959 = vpop.f32.mrb[0].mxu0
  %960 = vmatprep.mubr.f32.mxu0 0.0
  %961 = vmatmul.mubr.f32.gmra.mrb[0].mxu0 %v889
  %v962 = vpop.f32.mrb[0].mxu0
  %v963 = vadd.f32 0.0, %v962
  %v964 = vpop.f32.mrb[0].mxu0
  %965 = vdwg.mxu0
  %v966 = vadd.f32 %v515, %v958
  %v967 = vadd.f32 %v521, %v963
  %v968 = vxor.u32 %v966, 2147483648
  %v969 = vxor.u32 %v967, 2147483648
  %v970 = vmul.f32 %v968, 1.442695
  %v971 = vpow.pop %v970
  %v972 = vmul.f32 %v969, 1.442695
  %v973 = vpow.pop %v972
  %v974 = vadd.f32 %v971, 1.0
  %v975 = vadd.f32 %v973, 1.0
  %v976 = vrcp.pop %v974
  %v977 = vmul.f32 1.0, %v976
  %v978 = vrcp.pop %v975
  %v979 = vmul.f32 1.0, %v978
  %982 = vrot.lane.b32.xlu0 %v867, 64
  %v983 = vpop.permute.xlu0 %982
  %984 = vrot.lane.b32.xlu0 %v868, 64
  %v985 = vpop.permute.xlu0 %984
  %v988 = vmul.f32 %v977, %v983
  %v989 = vmul.f32 %v979, %v985
  %v990 = vtanh.pop %v966
  %v991 = vtanh.pop %v967
  %994 = vrot.lane.b32.xlu0 %v990, 80
  %v995 = vpop.permute.xlu0 %994
  %996 = vrot.lane.b32.xlu0 %v991, 80
  %v997 = vpop.permute.xlu0 %996
  %v1000 = vmul.f32 %v977, %v995
  %v1001 = vmul.f32 %v979, %v997
  %1004 = vrot.lane.b32.xlu0 %v1000, 16
  %v1005 = vpop.permute.xlu0 %1004
  %1006 = vrot.lane.b32.xlu0 %v1001, 16
  %v1007 = vpop.permute.xlu0 %1006
  %v1010 = vadd.f32 %v988, %v1005
  %v1011 = vadd.f32 %v989, %v1007
  %v1012 = vtanh.pop %v1010
  %v1013 = vtanh.pop %v1011
  %1016 = vrot.lane.b32.xlu0 %v1012, 16
  %v1017 = vpop.permute.xlu0 %1016
  %1018 = vrot.lane.b32.xlu0 %v1013, 16
  %v1019 = vpop.permute.xlu0 %1018
  %v1022 = vmul.f32 %v977, %v1017
  %v1023 = vmul.f32 %v979, %v1019
  %1026 = vrot.lane.b32.xlu0 %v1022, 96
  %v1027 = vpop.permute.xlu0 %1026
  %1028 = vrot.lane.b32.xlu0 %v1023, 96
  %v1029 = vpop.permute.xlu0 %1028
  %v1030 = vsel %vm33, %v1027, 0
  %v1032 = vsel %vm33, %v1029, 0
  %1034 = vmatprep.subr.mxu0 0.0
  %1035 = vmatpush1.msra.mxu0 %v600
  %1036 = vmatprep.subr.mxu0 0.0
  %1037 = vmatpush1.msra.mxu0 %v601
  %1038 = vmatprep.subr.mxu0 0.0
  %1039 = vmatpush1.msra.mxu0 0.0
  %1040 = vmatprep.subr.mxu0 0.0
  %1041 = vmatpush1.msra.mxu0 0.0
  %1042 = vmatprep.subr.mxu0 0.0
  %1043 = vmatpush1.msra.mxu0 0.0
  %1044 = vmatprep.subr.mxu0 0.0
  %1045 = vmatpush1.msra.mxu0 0.0
  %1046 = vmatprep.subr.mxu0 0.0
  %1047 = vmatpush1.msra.mxu0 0.0
  %1048 = vmatprep.subr.mxu0 0.0
  %1049 = vmatpush1.msra.mxu0 0.0
  %1050 = vmatprep.subr.mxu0 0.0
  %1051 = vmatpush1.msra.mxu0 0.0
  %1052 = vmatprep.subr.mxu0 0.0
  %1053 = vmatpush1.msra.mxu0 0.0
  %1054 = vmatprep.subr.mxu0 0.0
  %1055 = vmatpush1.msra.mxu0 0.0
  %1056 = vmatprep.subr.mxu0 0.0
  %1057 = vmatpush1.msra.mxu0 0.0
  %1058 = vmatprep.subr.mxu0 0.0
  %1059 = vmatpush1.msra.mxu0 0.0
  %1060 = vmatprep.subr.mxu0 0.0
  %1061 = vmatpush1.msra.mxu0 0.0
  %1062 = vmatprep.subr.mxu0 0.0
  %1063 = vmatpush1.msra.mxu0 0.0
  %1064 = vmatprep.subr.mxu0 0.0
  %1065 = vmatpush1.msra.mxu0 0.0
  %1066 = vmatprep.subr.mxu0 0.0
  %1067 = vmatpush1.msra.mxu0 0.0
  %1068 = vmatprep.subr.mxu0 0.0
  %1069 = vmatpush1.msra.mxu0 0.0
  %1070 = vmatprep.subr.mxu0 0.0
  %1071 = vmatpush1.msra.mxu0 0.0
  %1072 = vmatprep.subr.mxu0 0.0
  %1073 = vmatpush1.msra.mxu0 0.0
  %1074 = vmatprep.subr.mxu0 0.0
  %1075 = vmatpush1.msra.mxu0 0.0
  %1076 = vmatprep.subr.mxu0 0.0
  %1077 = vmatpush1.msra.mxu0 0.0
  %1078 = vmatprep.subr.mxu0 0.0
  %1079 = vmatpush1.msra.mxu0 0.0
  %1080 = vmatprep.subr.mxu0 0.0
  %1081 = vmatpush1.msra.mxu0 0.0
  %1082 = vmatprep.subr.mxu0 0.0
  %1083 = vmatpush1.msra.mxu0 0.0
  %1084 = vmatprep.subr.mxu0 0.0
  %1085 = vmatpush1.msra.mxu0 0.0
  %1086 = vmatprep.subr.mxu0 0.0
  %1087 = vmatpush1.msra.mxu0 0.0
  %1088 = vmatprep.subr.mxu0 0.0
  %1089 = vmatpush1.msra.mxu0 0.0
  %1090 = vmatprep.subr.mxu0 0.0
  %1091 = vmatpush1.msra.mxu0 0.0
  %1092 = vmatprep.subr.mxu0 0.0
  %1093 = vmatpush1.msra.mxu0 0.0
  %1094 = vmatprep.subr.mxu0 0.0
  %1095 = vmatpush1.msra.mxu0 0.0
  %1096 = vmatprep.subr.mxu0 0.0
  %1097 = vmatpush1.msra.mxu0 0.0
  %1098 = vmatprep.mubr.f32.mxu0 0.0
  %1099 = vmatmul.mubr.f32.gmra.mrb[0].mxu0 %v1030
  %v1100 = vpop.f32.mrb[0].mxu0
  %v1101 = vadd.f32 0.0, %v1100
  %v1102 = vpop.f32.mrb[0].mxu0
  %1103 = vmatprep.mubr.f32.mxu0 0.0
  %1104 = vmatmul.mubr.f32.gmra.mrb[0].mxu0 %v1032
  %v1105 = vpop.f32.mrb[0].mxu0
  %v1106 = vadd.f32 0.0, %v1105
  %v1107 = vpop.f32.mrb[0].mxu0
  %1108 = vdwg.mxu0
  %1111 = vrot.lane.b32.xlu0 %v1101, 64
  %v1112 = vpop.permute.xlu0 %1111
  %1113 = vrot.lane.b32.xlu0 %v1106, 64
  %v1114 = vpop.permute.xlu0 %1113
  %v1117 = vadd.f32 %v515, %v1112
  %v1118 = vadd.f32 %v521, %v1114
  %v1119 = vxor.u32 %v1117, 2147483648
  %v1120 = vxor.u32 %v1118, 2147483648
  %v1121 = vmul.f32 %v1119, 1.442695
  %v1122 = vpow.pop %v1121
  %v1123 = vmul.f32 %v1120, 1.442695
  %v1124 = vpow.pop %v1123
  %v1125 = vadd.f32 %v1122, 1.0
  %v1126 = vadd.f32 %v1124, 1.0
  %v1127 = vrcp.pop %v1125
  %v1128 = vmul.f32 1.0, %v1127
  %v1129 = vrcp.pop %v1126
  %v1130 = vmul.f32 1.0, %v1129
  %1133 = vrot.lane.b32.xlu0 %v1010, 64
  %v1134 = vpop.permute.xlu0 %1133
  %1135 = vrot.lane.b32.xlu0 %v1011, 64
  %v1136 = vpop.permute.xlu0 %1135
  %v1139 = vmul.f32 %v1128, %v1134
  %v1140 = vmul.f32 %v1130, %v1136
  %v1141 = vtanh.pop %v1117
  %v1142 = vtanh.pop %v1118
  %1145 = vrot.lane.b32.xlu0 %v1141, 80
  %v1146 = vpop.permute.xlu0 %1145
  %1147 = vrot.lane.b32.xlu0 %v1142, 80
  %v1148 = vpop.permute.xlu0 %1147
  %v1151 = vmul.f32 %v1128, %v1146
  %v1152 = vmul.f32 %v1130, %v1148
  %1155 = vrot.lane.b32.xlu0 %v1151, 16
  %v1156 = vpop.permute.xlu0 %1155
  %1157 = vrot.lane.b32.xlu0 %v1152, 16
  %v1158 = vpop.permute.xlu0 %1157
  %v1161 = vadd.f32 %v1139, %v1156
  %v1162 = vadd.f32 %v1140, %v1158
  %v1163 = vtanh.pop %v1161
  %v1164 = vtanh.pop %v1162
  %1167 = vrot.lane.b32.xlu0 %v1163, 16
  %v1168 = vpop.permute.xlu0 %1167
  %1169 = vrot.lane.b32.xlu0 %v1164, 16
  %v1170 = vpop.permute.xlu0 %1169
  %v1173 = vmul.f32 %v1128, %v1168
  %v1174 = vmul.f32 %v1130, %v1170
  %1177 = vrot.lane.b32.xlu0 %v1173, 32
  %v1178 = vpop.permute.xlu0 %1177
  %1179 = vrot.lane.b32.xlu0 %v1174, 32
  %v1180 = vpop.permute.xlu0 %1179
  %v1181 = vsel %vm33, %v1178, 0
  %v1183 = vsel %vm33, %v1180, 0
  %1185 = vmatprep.subr.mxu0 0.0
  %1186 = vmatpush1.msra.mxu0 %v600
  %1187 = vmatprep.subr.mxu0 0.0
  %1188 = vmatpush1.msra.mxu0 %v601
  %1189 = vmatprep.subr.mxu0 0.0
  %1190 = vmatpush1.msra.mxu0 0.0
  %1191 = vmatprep.subr.mxu0 0.0
  %1192 = vmatpush1.msra.mxu0 0.0
  %1193 = vmatprep.subr.mxu0 0.0
  %1194 = vmatpush1.msra.mxu0 0.0
  %1195 = vmatprep.subr.mxu0 0.0
  %1196 = vmatpush1.msra.mxu0 0.0
  %1197 = vmatprep.subr.mxu0 0.0
  %1198 = vmatpush1.msra.mxu0 0.0
  %1199 = vmatprep.subr.mxu0 0.0
  %1200 = vmatpush1.msra.mxu0 0.0
  %1201 = vmatprep.subr.mxu0 0.0
  %1202 = vmatpush1.msra.mxu0 0.0
  %1203 = vmatprep.subr.mxu0 0.0
  %1204 = vmatpush1.msra.mxu0 0.0
  %1205 = vmatprep.subr.mxu0 0.0
  %1206 = vmatpush1.msra.mxu0 0.0
  %1207 = vmatprep.subr.mxu0 0.0
  %1208 = vmatpush1.msra.mxu0 0.0
  %1209 = vmatprep.subr.mxu0 0.0
  %1210 = vmatpush1.msra.mxu0 0.0
  %1211 = vmatprep.subr.mxu0 0.0
  %1212 = vmatpush1.msra.mxu0 0.0
  %1213 = vmatprep.subr.mxu0 0.0
  %1214 = vmatpush1.msra.mxu0 0.0
  %1215 = vmatprep.subr.mxu0 0.0
  %1216 = vmatpush1.msra.mxu0 0.0
  %1217 = vmatprep.subr.mxu0 0.0
  %1218 = vmatpush1.msra.mxu0 0.0
  %1219 = vmatprep.subr.mxu0 0.0
  %1220 = vmatpush1.msra.mxu0 0.0
  %1221 = vmatprep.subr.mxu0 0.0
  %1222 = vmatpush1.msra.mxu0 0.0
  %1223 = vmatprep.subr.mxu0 0.0
  %1224 = vmatpush1.msra.mxu0 0.0
  %1225 = vmatprep.subr.mxu0 0.0
  %1226 = vmatpush1.msra.mxu0 0.0
  %1227 = vmatprep.subr.mxu0 0.0
  %1228 = vmatpush1.msra.mxu0 0.0
  %1229 = vmatprep.subr.mxu0 0.0
  %1230 = vmatpush1.msra.mxu0 0.0
  %1231 = vmatprep.subr.mxu0 0.0
  %1232 = vmatpush1.msra.mxu0 0.0
  %1233 = vmatprep.subr.mxu0 0.0
  %1234 = vmatpush1.msra.mxu0 0.0
  %1235 = vmatprep.subr.mxu0 0.0
  %1236 = vmatpush1.msra.mxu0 0.0
  %1237 = vmatprep.subr.mxu0 0.0
  %1238 = vmatpush1.msra.mxu0 0.0
  %1239 = vmatprep.subr.mxu0 0.0
  %1240 = vmatpush1.msra.mxu0 0.0
  %1241 = vmatprep.subr.mxu0 0.0
  %1242 = vmatpush1.msra.mxu0 0.0
  %1243 = vmatprep.subr.mxu0 0.0
  %1244 = vmatpush1.msra.mxu0 0.0
  %1245 = vmatprep.subr.mxu0 0.0
  %1246 = vmatpush1.msra.mxu0 0.0
  %1247 = vmatprep.subr.mxu0 0.0
  %1248 = vmatpush1.msra.mxu0 0.0
  %1249 = vmatprep.mubr.f32.mxu0 0.0
  %1250 = vmatmul.mubr.f32.gmra.mrb[0].mxu0 %v1181
  %v1251 = vpop.f32.mrb[0].mxu0
  %v1252 = vadd.f32 0.0, %v1251
  %v1253 = vpop.f32.mrb[0].mxu0
  %1254 = vmatprep.mubr.f32.mxu0 0.0
  %1255 = vmatmul.mubr.f32.gmra.mrb[0].mxu0 %v1183
  %v1256 = vpop.f32.mrb[0].mxu0
  %v1257 = vadd.f32 0.0, %v1256
  %v1258 = vpop.f32.mrb[0].mxu0
  %1259 = vdwg.mxu0
  %v1260 = vadd.f32 %v590, %v1252
  %v1261 = vadd.f32 %v596, %v1257
  %v1262 = vxor.u32 %v1260, 2147483648
  %v1263 = vxor.u32 %v1261, 2147483648
  %v1264 = vmul.f32 %v1262, 1.442695
  %v1265 = vpow.pop %v1264
  %v1266 = vmul.f32 %v1263, 1.442695
  %v1267 = vpow.pop %v1266
  %v1268 = vadd.f32 %v1265, 1.0
  %v1269 = vadd.f32 %v1267, 1.0
  %v1270 = vrcp.pop %v1268
  %v1271 = vmul.f32 1.0, %v1270
  %v1272 = vrcp.pop %v1269
  %v1273 = vmul.f32 1.0, %v1272
  %1276 = vrot.lane.b32.xlu0 %v1161, 64
  %v1277 = vpop.permute.xlu0 %1276
  %1278 = vrot.lane.b32.xlu0 %v1162, 64
  %v1279 = vpop.permute.xlu0 %1278
  %v1282 = vmul.f32 %v1271, %v1277
  %v1283 = vmul.f32 %v1273, %v1279
  %v1284 = vtanh.pop %v1260
  %v1285 = vtanh.pop %v1261
  %1288 = vrot.lane.b32.xlu0 %v1284, 80
  %v1289 = vpop.permute.xlu0 %1288
  %1290 = vrot.lane.b32.xlu0 %v1285, 80
  %v1291 = vpop.permute.xlu0 %1290
  %v1294 = vmul.f32 %v1271, %v1289
  %v1295 = vmul.f32 %v1273, %v1291
  %1298 = vrot.lane.b32.xlu0 %v1294, 16
  %v1299 = vpop.permute.xlu0 %1298
  %1300 = vrot.lane.b32.xlu0 %v1295, 16
  %v1301 = vpop.permute.xlu0 %1300
  %v1304 = vadd.f32 %v1282, %v1299
  %v1305 = vadd.f32 %v1283, %v1301
  %v1306 = vtanh.pop %v1304
  %v1307 = vtanh.pop %v1305
  %1310 = vrot.lane.b32.xlu0 %v1306, 16
  %v1311 = vpop.permute.xlu0 %1310
  %1312 = vrot.lane.b32.xlu0 %v1307, 16
  %v1313 = vpop.permute.xlu0 %1312
  %v1316 = vmul.f32 %v1271, %v1311
  %v1317 = vmul.f32 %v1273, %v1313
  %1320 = vrot.lane.b32.xlu0 %v1316, 96
  %v1321 = vpop.permute.xlu0 %1320
  %1322 = vrot.lane.b32.xlu0 %v1317, 96
  %v1323 = vpop.permute.xlu0 %1322
  %v1324 = vsel %vm33, %v1321, 0
  %v1326 = vsel %vm33, %v1323, 0
  %1328 = vmatprep.subr.mxu0 0.0
  %1329 = vmatpush1.msra.mxu0 %v600
  %1330 = vmatprep.subr.mxu0 0.0
  %1331 = vmatpush1.msra.mxu0 %v601
  %1332 = vmatprep.subr.mxu0 0.0
  %1333 = vmatpush1.msra.mxu0 0.0
  %1334 = vmatprep.subr.mxu0 0.0
  %1335 = vmatpush1.msra.mxu0 0.0
  %1336 = vmatprep.subr.mxu0 0.0
  %1337 = vmatpush1.msra.mxu0 0.0
  %1338 = vmatprep.subr.mxu0 0.0
  %1339 = vmatpush1.msra.mxu0 0.0
  %1340 = vmatprep.subr.mxu0 0.0
  %1341 = vmatpush1.msra.mxu0 0.0
  %1342 = vmatprep.subr.mxu0 0.0
  %1343 = vmatpush1.msra.mxu0 0.0
  %1344 = vmatprep.subr.mxu0 0.0
  %1345 = vmatpush1.msra.mxu0 0.0
  %1346 = vmatprep.subr.mxu0 0.0
  %1347 = vmatpush1.msra.mxu0 0.0
  %1348 = vmatprep.subr.mxu0 0.0
  %1349 = vmatpush1.msra.mxu0 0.0
  %1350 = vmatprep.subr.mxu0 0.0
  %1351 = vmatpush1.msra.mxu0 0.0
  %1352 = vmatprep.subr.mxu0 0.0
  %1353 = vmatpush1.msra.mxu0 0.0
  %1354 = vmatprep.subr.mxu0 0.0
  %1355 = vmatpush1.msra.mxu0 0.0
  %1356 = vmatprep.subr.mxu0 0.0
  %1357 = vmatpush1.msra.mxu0 0.0
  %1358 = vmatprep.subr.mxu0 0.0
  %1359 = vmatpush1.msra.mxu0 0.0
  %1360 = vmatprep.subr.mxu0 0.0
  %1361 = vmatpush1.msra.mxu0 0.0
  %1362 = vmatprep.subr.mxu0 0.0
  %1363 = vmatpush1.msra.mxu0 0.0
  %1364 = vmatprep.subr.mxu0 0.0
  %1365 = vmatpush1.msra.mxu0 0.0
  %1366 = vmatprep.subr.mxu0 0.0
  %1367 = vmatpush1.msra.mxu0 0.0
  %1368 = vmatprep.subr.mxu0 0.0
  %1369 = vmatpush1.msra.mxu0 0.0
  %1370 = vmatprep.subr.mxu0 0.0
  %1371 = vmatpush1.msra.mxu0 0.0
  %1372 = vmatprep.subr.mxu0 0.0
  %1373 = vmatpush1.msra.mxu0 0.0
  %1374 = vmatprep.subr.mxu0 0.0
  %1375 = vmatpush1.msra.mxu0 0.0
  %1376 = vmatprep.subr.mxu0 0.0
  %1377 = vmatpush1.msra.mxu0 0.0
  %1378 = vmatprep.subr.mxu0 0.0
  %1379 = vmatpush1.msra.mxu0 0.0
  %1380 = vmatprep.subr.mxu0 0.0
  %1381 = vmatpush1.msra.mxu0 0.0
  %1382 = vmatprep.subr.mxu0 0.0
  %1383 = vmatpush1.msra.mxu0 0.0
  %1384 = vmatprep.subr.mxu0 0.0
  %1385 = vmatpush1.msra.mxu0 0.0
  %1386 = vmatprep.subr.mxu0 0.0
  %1387 = vmatpush1.msra.mxu0 0.0
  %1388 = vmatprep.subr.mxu0 0.0
  %1389 = vmatpush1.msra.mxu0 0.0
  %1390 = vmatprep.subr.mxu0 0.0
  %1391 = vmatpush1.msra.mxu0 0.0
  %1392 = vmatprep.mubr.f32.mxu0 0.0
  %1393 = vmatmul.mubr.f32.gmra.mrb[0].mxu0 %v1324
  %v1394 = vpop.f32.mrb[0].mxu0
  %v1395 = vadd.f32 0.0, %v1394
  %v1396 = vpop.f32.mrb[0].mxu0
  %1397 = vmatprep.mubr.f32.mxu0 0.0
  %1398 = vmatmul.mubr.f32.gmra.mrb[0].mxu0 %v1326
  %v1399 = vpop.f32.mrb[0].mxu0
  %v1400 = vadd.f32 0.0, %v1399
  %v1401 = vpop.f32.mrb[0].mxu0
  %1402 = vdwg.mxu0
  %1405 = vrot.lane.b32.xlu0 %v1395, 64
  %v1406 = vpop.permute.xlu0 %1405
  %1407 = vrot.lane.b32.xlu0 %v1400, 64
  %v1408 = vpop.permute.xlu0 %1407
  %v1411 = vadd.f32 %v590, %v1406
  %v1412 = vadd.f32 %v596, %v1408
  %v1413 = vxor.u32 %v1411, 2147483648
  %v1414 = vxor.u32 %v1412, 2147483648
  %v1415 = vmul.f32 %v1413, 1.442695
  %v1416 = vpow.pop %v1415
  %v1417 = vmul.f32 %v1414, 1.442695
  %v1418 = vpow.pop %v1417
  %v1419 = vadd.f32 %v1416, 1.0
  %v1420 = vadd.f32 %v1418, 1.0
  %v1421 = vrcp.pop %v1419
  %v1422 = vmul.f32 1.0, %v1421
  %v1423 = vrcp.pop %v1420
  %v1424 = vmul.f32 1.0, %v1423
  %1427 = vrot.lane.b32.xlu0 %v1304, 64
  %v1428 = vpop.permute.xlu0 %1427
  %1429 = vrot.lane.b32.xlu0 %v1305, 64
  %v1430 = vpop.permute.xlu0 %1429
  %v1433 = vmul.f32 %v1422, %v1428
  %v1434 = vmul.f32 %v1424, %v1430
  %v1435 = vtanh.pop %v1411
  %v1436 = vtanh.pop %v1412
  %1439 = vrot.lane.b32.xlu0 %v1435, 80
  %v1440 = vpop.permute.xlu0 %1439
  %1441 = vrot.lane.b32.xlu0 %v1436, 80
  %v1442 = vpop.permute.xlu0 %1441
  %v1445 = vmul.f32 %v1422, %v1440
  %v1446 = vmul.f32 %v1424, %v1442
  %1449 = vrot.lane.b32.xlu0 %v1445, 16
  %v1450 = vpop.permute.xlu0 %1449
  %1451 = vrot.lane.b32.xlu0 %v1446, 16
  %v1452 = vpop.permute.xlu0 %1451
  %v1455 = vadd.f32 %v1433, %v1450
  %v1456 = vadd.f32 %v1434, %v1452
  %v1457 = vtanh.pop %v1455
  %v1458 = vtanh.pop %v1456
  %1461 = vrot.lane.b32.xlu0 %v1457, 16
  %v1462 = vpop.permute.xlu0 %1461
  %1463 = vrot.lane.b32.xlu0 %v1458, 16
  %v1464 = vpop.permute.xlu0 %1463
  %v1467 = vmul.f32 %v1422, %v1462
  %v1468 = vmul.f32 %v1424, %v1464
  %1471 = vrot.lane.b32.xlu0 %v1467, 32
  %v1472 = vpop.permute.xlu0 %1471
  %1473 = vrot.lane.b32.xlu0 %v1468, 32
  %v1474 = vpop.permute.xlu0 %1473
  %v1475 = vsel %vm33, %v1472, 0
  %v1477 = vsel %vm33, %v1474, 0
  %1479 = vmatprep.subr.mxu0 0.0
  %1480 = vmatpush1.msra.mxu0 %v600
  %1481 = vmatprep.subr.mxu0 0.0
  %1482 = vmatpush1.msra.mxu0 %v601
  %1483 = vmatprep.subr.mxu0 0.0
  %1484 = vmatpush1.msra.mxu0 0.0
  %1485 = vmatprep.subr.mxu0 0.0
  %1486 = vmatpush1.msra.mxu0 0.0
  %1487 = vmatprep.subr.mxu0 0.0
  %1488 = vmatpush1.msra.mxu0 0.0
  %1489 = vmatprep.subr.mxu0 0.0
  %1490 = vmatpush1.msra.mxu0 0.0
  %1491 = vmatprep.subr.mxu0 0.0
  %1492 = vmatpush1.msra.mxu0 0.0
  %1493 = vmatprep.subr.mxu0 0.0
  %1494 = vmatpush1.msra.mxu0 0.0
  %1495 = vmatprep.subr.mxu0 0.0
  %1496 = vmatpush1.msra.mxu0 0.0
  %1497 = vmatprep.subr.mxu0 0.0
  %1498 = vmatpush1.msra.mxu0 0.0
  %1499 = vmatprep.subr.mxu0 0.0
  %1500 = vmatpush1.msra.mxu0 0.0
  %1501 = vmatprep.subr.mxu0 0.0
  %1502 = vmatpush1.msra.mxu0 0.0
  %1503 = vmatprep.subr.mxu0 0.0
  %1504 = vmatpush1.msra.mxu0 0.0
  %1505 = vmatprep.subr.mxu0 0.0
  %1506 = vmatpush1.msra.mxu0 0.0
  %1507 = vmatprep.subr.mxu0 0.0
  %1508 = vmatpush1.msra.mxu0 0.0
  %1509 = vmatprep.subr.mxu0 0.0
  %1510 = vmatpush1.msra.mxu0 0.0
  %1511 = vmatprep.subr.mxu0 0.0
  %1512 = vmatpush1.msra.mxu0 0.0
  %1513 = vmatprep.subr.mxu0 0.0
  %1514 = vmatpush1.msra.mxu0 0.0
  %1515 = vmatprep.subr.mxu0 0.0
  %1516 = vmatpush1.msra.mxu0 0.0
  %1517 = vmatprep.subr.mxu0 0.0
  %1518 = vmatpush1.msra.mxu0 0.0
  %1519 = vmatprep.subr.mxu0 0.0
  %1520 = vmatpush1.msra.mxu0 0.0
  %1521 = vmatprep.subr.mxu0 0.0
  %1522 = vmatpush1.msra.mxu0 0.0
  %1523 = vmatprep.subr.mxu0 0.0
  %1524 = vmatpush1.msra.mxu0 0.0
  %1525 = vmatprep.subr.mxu0 0.0
  %1526 = vmatpush1.msra.mxu0 0.0
  %1527 = vmatprep.subr.mxu0 0.0
  %1528 = vmatpush1.msra.mxu0 0.0
  %1529 = vmatprep.subr.mxu0 0.0
  %1530 = vmatpush1.msra.mxu0 0.0
  %1531 = vmatprep.subr.mxu0 0.0
  %1532 = vmatpush1.msra.mxu0 0.0
  %1533 = vmatprep.subr.mxu0 0.0
  %1534 = vmatpush1.msra.mxu0 0.0
  %1535 = vmatprep.subr.mxu0 0.0
  %1536 = vmatpush1.msra.mxu0 0.0
  %1537 = vmatprep.subr.mxu0 0.0
  %1538 = vmatpush1.msra.mxu0 0.0
  %1539 = vmatprep.subr.mxu0 0.0
  %1540 = vmatpush1.msra.mxu0 0.0
  %1541 = vmatprep.subr.mxu0 0.0
  %1542 = vmatpush1.msra.mxu0 0.0
  %1543 = vmatprep.mubr.f32.mxu0 0.0
  %1544 = vmatmul.mubr.f32.gmra.mrb[0].mxu0 %v1475
  %v1545 = vpop.f32.mrb[0].mxu0
  %v1546 = vadd.f32 0.0, %v1545
  %v1547 = vpop.f32.mrb[0].mxu0
  %1548 = vmatprep.mubr.f32.mxu0 0.0
  %1549 = vmatmul.mubr.f32.gmra.mrb[0].mxu0 %v1477
  %v1550 = vpop.f32.mrb[0].mxu0
  %v1551 = vadd.f32 0.0, %v1550
  %v1552 = vpop.f32.mrb[0].mxu0
  %1553 = vdwg.mxu0
  %v1554 = vadd.f32 %v592, %v1546
  %v1555 = vadd.f32 %v598, %v1551
  %v1556 = vxor.u32 %v1554, 2147483648
  %v1557 = vxor.u32 %v1555, 2147483648
  %v1558 = vmul.f32 %v1556, 1.442695
  %v1559 = vpow.pop %v1558
  %v1560 = vmul.f32 %v1557, 1.442695
  %v1561 = vpow.pop %v1560
  %v1562 = vadd.f32 %v1559, 1.0
  %v1563 = vadd.f32 %v1561, 1.0
  %v1564 = vrcp.pop %v1562
  %v1565 = vmul.f32 1.0, %v1564
  %v1566 = vrcp.pop %v1563
  %v1567 = vmul.f32 1.0, %v1566
  %1570 = vrot.lane.b32.xlu0 %v1455, 64
  %v1571 = vpop.permute.xlu0 %1570
  %1572 = vrot.lane.b32.xlu0 %v1456, 64
  %v1573 = vpop.permute.xlu0 %1572
  %v1576 = vmul.f32 %v1565, %v1571
  %v1577 = vmul.f32 %v1567, %v1573
  %v1578 = vtanh.pop %v1554
  %v1579 = vtanh.pop %v1555
  %1582 = vrot.lane.b32.xlu0 %v1578, 80
  %v1583 = vpop.permute.xlu0 %1582
  %1584 = vrot.lane.b32.xlu0 %v1579, 80
  %v1585 = vpop.permute.xlu0 %1584
  %v1588 = vmul.f32 %v1565, %v1583
  %v1589 = vmul.f32 %v1567, %v1585
  %1592 = vrot.lane.b32.xlu0 %v1588, 16
  %v1593 = vpop.permute.xlu0 %1592
  %1594 = vrot.lane.b32.xlu0 %v1589, 16
  %v1595 = vpop.permute.xlu0 %1594
  %v1598 = vadd.f32 %v1576, %v1593
  %v1599 = vadd.f32 %v1577, %v1595
  %v1600 = vtanh.pop %v1598
  %v1601 = vtanh.pop %v1599
  %1604 = vrot.lane.b32.xlu0 %v1600, 16
  %v1605 = vpop.permute.xlu0 %1604
  %1606 = vrot.lane.b32.xlu0 %v1601, 16
  %v1607 = vpop.permute.xlu0 %1606
  %v1610 = vmul.f32 %v1565, %v1605
  %v1611 = vmul.f32 %v1567, %v1607
  %1614 = vrot.lane.b32.xlu0 %v1610, 96
  %v1615 = vpop.permute.xlu0 %1614
  %1616 = vrot.lane.b32.xlu0 %v1611, 96
  %v1617 = vpop.permute.xlu0 %1616
  %v1618 = vsel %vm33, %v1615, 0
  %v1620 = vsel %vm33, %v1617, 0
  %1622 = vmatprep.subr.mxu0 0.0
  %1623 = vmatpush1.msra.mxu0 %v600
  %1624 = vmatprep.subr.mxu0 0.0
  %1625 = vmatpush1.msra.mxu0 %v601
  %1626 = vmatprep.subr.mxu0 0.0
  %1627 = vmatpush1.msra.mxu0 0.0
  %1628 = vmatprep.subr.mxu0 0.0
  %1629 = vmatpush1.msra.mxu0 0.0
  %1630 = vmatprep.subr.mxu0 0.0
  %1631 = vmatpush1.msra.mxu0 0.0
  %1632 = vmatprep.subr.mxu0 0.0
  %1633 = vmatpush1.msra.mxu0 0.0
  %1634 = vmatprep.subr.mxu0 0.0
  %1635 = vmatpush1.msra.mxu0 0.0
  %1636 = vmatprep.subr.mxu0 0.0
  %1637 = vmatpush1.msra.mxu0 0.0
  %1638 = vmatprep.subr.mxu0 0.0
  %1639 = vmatpush1.msra.mxu0 0.0
  %1640 = vmatprep.subr.mxu0 0.0
  %1641 = vmatpush1.msra.mxu0 0.0
  %1642 = vmatprep.subr.mxu0 0.0
  %1643 = vmatpush1.msra.mxu0 0.0
  %1644 = vmatprep.subr.mxu0 0.0
  %1645 = vmatpush1.msra.mxu0 0.0
  %1646 = vmatprep.subr.mxu0 0.0
  %1647 = vmatpush1.msra.mxu0 0.0
  %1648 = vmatprep.subr.mxu0 0.0
  %1649 = vmatpush1.msra.mxu0 0.0
  %1650 = vmatprep.subr.mxu0 0.0
  %1651 = vmatpush1.msra.mxu0 0.0
  %1652 = vmatprep.subr.mxu0 0.0
  %1653 = vmatpush1.msra.mxu0 0.0
  %1654 = vmatprep.subr.mxu0 0.0
  %1655 = vmatpush1.msra.mxu0 0.0
  %1656 = vmatprep.subr.mxu0 0.0
  %1657 = vmatpush1.msra.mxu0 0.0
  %1658 = vmatprep.subr.mxu0 0.0
  %1659 = vmatpush1.msra.mxu0 0.0
  %1660 = vmatprep.subr.mxu0 0.0
  %1661 = vmatpush1.msra.mxu0 0.0
  %1662 = vmatprep.subr.mxu0 0.0
  %1663 = vmatpush1.msra.mxu0 0.0
  %1664 = vmatprep.subr.mxu0 0.0
  %1665 = vmatpush1.msra.mxu0 0.0
  %1666 = vmatprep.subr.mxu0 0.0
  %1667 = vmatpush1.msra.mxu0 0.0
  %1668 = vmatprep.subr.mxu0 0.0
  %1669 = vmatpush1.msra.mxu0 0.0
  %1670 = vmatprep.subr.mxu0 0.0
  %1671 = vmatpush1.msra.mxu0 0.0
  %1672 = vmatprep.subr.mxu0 0.0
  %1673 = vmatpush1.msra.mxu0 0.0
  %1674 = vmatprep.subr.mxu0 0.0
  %1675 = vmatpush1.msra.mxu0 0.0
  %1676 = vmatprep.subr.mxu0 0.0
  %1677 = vmatpush1.msra.mxu0 0.0
  %1678 = vmatprep.subr.mxu0 0.0
  %1679 = vmatpush1.msra.mxu0 0.0
  %1680 = vmatprep.subr.mxu0 0.0
  %1681 = vmatpush1.msra.mxu0 0.0
  %1682 = vmatprep.subr.mxu0 0.0
  %1683 = vmatpush1.msra.mxu0 0.0
  %1684 = vmatprep.subr.mxu0 0.0
  %1685 = vmatpush1.msra.mxu0 0.0
  %1686 = vmatprep.mubr.f32.mxu0 0.0
  %1687 = vmatmul.mubr.f32.gmra.mrb[0].mxu0 %v1618
  %v1688 = vpop.f32.mrb[0].mxu0
  %v1689 = vadd.f32 0.0, %v1688
  %v1690 = vpop.f32.mrb[0].mxu0
  %1691 = vmatprep.mubr.f32.mxu0 0.0
  %1692 = vmatmul.mubr.f32.gmra.mrb[0].mxu0 %v1620
  %v1693 = vpop.f32.mrb[0].mxu0
  %v1694 = vadd.f32 0.0, %v1693
  %v1695 = vpop.f32.mrb[0].mxu0
  %1696 = vdwg.mxu0
  %1699 = vrot.lane.b32.xlu0 %v1689, 64
  %v1700 = vpop.permute.xlu0 %1699
  %1701 = vrot.lane.b32.xlu0 %v1694, 64
  %v1702 = vpop.permute.xlu0 %1701
  %v1705 = vadd.f32 %v592, %v1700
  %v1706 = vadd.f32 %v598, %v1702
  %v1707 = vxor.u32 %v1705, 2147483648
  %v1708 = vxor.u32 %v1706, 2147483648
  %v1709 = vmul.f32 %v1707, 1.442695
  %v1710 = vpow.pop %v1709
  %v1711 = vmul.f32 %v1708, 1.442695
  %v1712 = vpow.pop %v1711
  %v1713 = vadd.f32 %v1710, 1.0
  %v1714 = vadd.f32 %v1712, 1.0
  %v1715 = vrcp.pop %v1713
  %v1716 = vmul.f32 1.0, %v1715
  %v1717 = vrcp.pop %v1714
  %v1718 = vmul.f32 1.0, %v1717
  %1721 = vrot.lane.b32.xlu0 %v1598, 64
  %v1722 = vpop.permute.xlu0 %1721
  %1723 = vrot.lane.b32.xlu0 %v1599, 64
  %v1724 = vpop.permute.xlu0 %1723
  %v1727 = vmul.f32 %v1716, %v1722
  %v1728 = vmul.f32 %v1718, %v1724
  %v1729 = vtanh.pop %v1705
  %v1730 = vtanh.pop %v1706
  %1733 = vrot.lane.b32.xlu0 %v1729, 80
  %v1734 = vpop.permute.xlu0 %1733
  %1735 = vrot.lane.b32.xlu0 %v1730, 80
  %v1736 = vpop.permute.xlu0 %1735
  %v1739 = vmul.f32 %v1716, %v1734
  %v1740 = vmul.f32 %v1718, %v1736
  %1743 = vrot.lane.b32.xlu0 %v1739, 16
  %v1744 = vpop.permute.xlu0 %1743
  %1745 = vrot.lane.b32.xlu0 %v1740, 16
  %v1746 = vpop.permute.xlu0 %1745
  %v1749 = vadd.f32 %v1727, %v1744
  %v1750 = vadd.f32 %v1728, %v1746
  %v1751 = vtanh.pop %v1749
  %v1752 = vtanh.pop %v1750
  %1755 = vrot.lane.b32.xlu0 %v1751, 16
  %v1756 = vpop.permute.xlu0 %1755
  %1757 = vrot.lane.b32.xlu0 %v1752, 16
  %v1758 = vpop.permute.xlu0 %1757
  %v1761 = vmul.f32 %v1716, %v1756
  %v1762 = vmul.f32 %v1718, %v1758
  %v1763 = vld [vmem:[%s5 + $0x58] sm:$0xff]
  %v1764 = vld [vmem:[%s5 + $0x60] sm:$0xff]
  %v1765 = vld [vmem:[%s5 + $0x68] sm:$0x1]
  %v1766 = vlaneseq
  %v1767 = vshrl.u32 %v1766, 7
  %v1768 = vsub.s32 0, %v1767
  %v1769 = vrot.slane %v1765, %v1768
  %1772 = vrot.lane.b32.xlu0 %v1761, 32
  %v1773 = vpop.permute.xlu0 %1772
  %1774 = vrot.lane.b32.xlu0 %v1762, 32
  %v1775 = vpop.permute.xlu0 %1774
  %v1776 = vsel %vm33, %v1773, 0
  %v1778 = vsel %vm33, %v1775, 0
  %1780 = vmatprep.subr.mxu0 0.0
  %1781 = vmatpush1.msra.mxu0 %v1763
  %1782 = vmatprep.subr.mxu0 0.0
  %1783 = vmatpush1.msra.mxu0 %v1764
  %1784 = vmatprep.subr.mxu0 0.0
  %1785 = vmatpush1.msra.mxu0 0.0
  %1786 = vmatprep.subr.mxu0 0.0
  %1787 = vmatpush1.msra.mxu0 0.0
  %1788 = vmatprep.subr.mxu0 0.0
  %1789 = vmatpush1.msra.mxu0 0.0
  %1790 = vmatprep.subr.mxu0 0.0
  %1791 = vmatpush1.msra.mxu0 0.0
  %1792 = vmatprep.subr.mxu0 0.0
  %1793 = vmatpush1.msra.mxu0 0.0
  %1794 = vmatprep.subr.mxu0 0.0
  %1795 = vmatpush1.msra.mxu0 0.0
  %1796 = vmatprep.subr.mxu0 0.0
  %1797 = vmatpush1.msra.mxu0 0.0
  %1798 = vmatprep.subr.mxu0 0.0
  %1799 = vmatpush1.msra.mxu0 0.0
  %1800 = vmatprep.subr.mxu0 0.0
  %1801 = vmatpush1.msra.mxu0 0.0
  %1802 = vmatprep.subr.mxu0 0.0
  %1803 = vmatpush1.msra.mxu0 0.0
  %1804 = vmatprep.subr.mxu0 0.0
  %1805 = vmatpush1.msra.mxu0 0.0
  %1806 = vmatprep.subr.mxu0 0.0
  %1807 = vmatpush1.msra.mxu0 0.0
  %1808 = vmatprep.subr.mxu0 0.0
  %1809 = vmatpush1.msra.mxu0 0.0
  %1810 = vmatprep.subr.mxu0 0.0
  %1811 = vmatpush1.msra.mxu0 0.0
  %1812 = vmatprep.subr.mxu0 0.0
  %1813 = vmatpush1.msra.mxu0 0.0
  %1814 = vmatprep.subr.mxu0 0.0
  %1815 = vmatpush1.msra.mxu0 0.0
  %1816 = vmatprep.subr.mxu0 0.0
  %1817 = vmatpush1.msra.mxu0 0.0
  %1818 = vmatprep.subr.mxu0 0.0
  %1819 = vmatpush1.msra.mxu0 0.0
  %1820 = vmatprep.subr.mxu0 0.0
  %1821 = vmatpush1.msra.mxu0 0.0
  %1822 = vmatprep.subr.mxu0 0.0
  %1823 = vmatpush1.msra.mxu0 0.0
  %1824 = vmatprep.subr.mxu0 0.0
  %1825 = vmatpush1.msra.mxu0 0.0
  %1826 = vmatprep.subr.mxu0 0.0
  %1827 = vmatpush1.msra.mxu0 0.0
  %1828 = vmatprep.subr.mxu0 0.0
  %1829 = vmatpush1.msra.mxu0 0.0
  %1830 = vmatprep.subr.mxu0 0.0
  %1831 = vmatpush1.msra.mxu0 0.0
  %1832 = vmatprep.subr.mxu0 0.0
  %1833 = vmatpush1.msra.mxu0 0.0
  %1834 = vmatprep.subr.mxu0 0.0
  %1835 = vmatpush1.msra.mxu0 0.0
  %1836 = vmatprep.subr.mxu0 0.0
  %1837 = vmatpush1.msra.mxu0 0.0
  %1838 = vmatprep.subr.mxu0 0.0
  %1839 = vmatpush1.msra.mxu0 0.0
  %1840 = vmatprep.subr.mxu0 0.0
  %1841 = vmatpush1.msra.mxu0 0.0
  %1842 = vmatprep.subr.mxu0 0.0
  %1843 = vmatpush1.msra.mxu0 0.0
  %1844 = vmatprep.mubr.f32.mxu0 0.0
  %1845 = vmatmul.mubr.f32.gmra.mrb[0].mxu0 %v1776
  %v1846 = vpop.f32.mrb[0].mxu0
  %v1847 = vadd.f32 %v1769, %v1846
  %v1848 = vpop.f32.mrb[0].mxu0
  %1849 = vmatprep.mubr.f32.mxu0 0.0
  %1850 = vmatmul.mubr.f32.gmra.mrb[0].mxu0 %v1778
  %v1851 = vpop.f32.mrb[0].mxu0
  %v1852 = vadd.f32 %v1769, %v1851
  %v1853 = vpop.f32.mrb[0].mxu0
  %1854 = vdwg.mxu0
  %1857 = vrot.lane.b32.xlu0 %v1847, 32
  %v1858 = vpop.permute.xlu0 %1857
  %1859 = vrot.lane.b32.xlu0 %v1852, 32
  %v1860 = vpop.permute.xlu0 %1859
  %v1863 = vsel %vm299, %v397, %v1858
  %v1864 = vsel %vm299, %v398, %v1860
  %v1865 = vld [vmem:[%s7] sm:$0xff]
  %v1866 = vld [vmem:[%s7 + $0x8] sm:$0xff]
  %v1867 = vld [vmem:[%s7 + $0x10] sm:$0xff]
  %v1868 = vld [vmem:[%s7 + $0x18] sm:$0xff]
  %v1869 = vld [vmem:[%s7 + $0x20] sm:$0xff]
  %v1870 = vld [vmem:[%s7 + $0x28] sm:$0xff]
  %v1871 = vld [vmem:[%s7 + $0x30] sm:$0xff]
  %v1872 = vld [vmem:[%s7 + $0x38] sm:$0xff]
  %v1873 = vld [vmem:[%s7 + $0x40] sm:$0x1]
  %v1874 = vlaneseq
  %v1875 = vshrl.u32 %v1874, 7
  %v1876 = vsub.s32 0, %v1875
  %v1877 = vrot.slane %v1873, %v1876
  %v1879 = vsel %vm315, %v1863, 0
  %v1882 = vsel %vm315, %v1864, 0
  %1884 = vmatprep.subr.mxu0 0.0
  %1885 = vmatpush1.msra.mxu0 %v1865
  %1886 = vmatprep.subr.mxu0 0.0
  %1887 = vmatpush1.msra.mxu0 %v1866
  %1888 = vmatprep.subr.mxu0 0.0
  %1889 = vmatpush1.msra.mxu0 %v1867
  %1890 = vmatprep.subr.mxu0 0.0
  %1891 = vmatpush1.msra.mxu0 %v1868
  %1892 = vmatprep.subr.mxu0 0.0
  %1893 = vmatpush1.msra.mxu0 %v1869
  %1894 = vmatprep.subr.mxu0 0.0
  %1895 = vmatpush1.msra.mxu0 %v1870
  %1896 = vmatprep.subr.mxu0 0.0
  %1897 = vmatpush1.msra.mxu0 %v1871
  %1898 = vmatprep.subr.mxu0 0.0
  %1899 = vmatpush1.msra.mxu0 %v1872
  %1900 = vmatprep.subr.mxu0 0.0
  %1901 = vmatpush1.msra.mxu0 0.0
  %1902 = vmatprep.subr.mxu0 0.0
  %1903 = vmatpush1.msra.mxu0 0.0
  %1904 = vmatprep.subr.mxu0 0.0
  %1905 = vmatpush1.msra.mxu0 0.0
  %1906 = vmatprep.subr.mxu0 0.0
  %1907 = vmatpush1.msra.mxu0 0.0
  %1908 = vmatprep.subr.mxu0 0.0
  %1909 = vmatpush1.msra.mxu0 0.0
  %1910 = vmatprep.subr.mxu0 0.0
  %1911 = vmatpush1.msra.mxu0 0.0
  %1912 = vmatprep.subr.mxu0 0.0
  %1913 = vmatpush1.msra.mxu0 0.0
  %1914 = vmatprep.subr.mxu0 0.0
  %1915 = vmatpush1.msra.mxu0 0.0
  %1916 = vmatprep.subr.mxu0 0.0
  %1917 = vmatpush1.msra.mxu0 0.0
  %1918 = vmatprep.subr.mxu0 0.0
  %1919 = vmatpush1.msra.mxu0 0.0
  %1920 = vmatprep.subr.mxu0 0.0
  %1921 = vmatpush1.msra.mxu0 0.0
  %1922 = vmatprep.subr.mxu0 0.0
  %1923 = vmatpush1.msra.mxu0 0.0
  %1924 = vmatprep.subr.mxu0 0.0
  %1925 = vmatpush1.msra.mxu0 0.0
  %1926 = vmatprep.subr.mxu0 0.0
  %1927 = vmatpush1.msra.mxu0 0.0
  %1928 = vmatprep.subr.mxu0 0.0
  %1929 = vmatpush1.msra.mxu0 0.0
  %1930 = vmatprep.subr.mxu0 0.0
  %1931 = vmatpush1.msra.mxu0 0.0
  %1932 = vmatprep.subr.mxu0 0.0
  %1933 = vmatpush1.msra.mxu0 0.0
  %1934 = vmatprep.subr.mxu0 0.0
  %1935 = vmatpush1.msra.mxu0 0.0
  %1936 = vmatprep.subr.mxu0 0.0
  %1937 = vmatpush1.msra.mxu0 0.0
  %1938 = vmatprep.subr.mxu0 0.0
  %1939 = vmatpush1.msra.mxu0 0.0
  %1940 = vmatprep.subr.mxu0 0.0
  %1941 = vmatpush1.msra.mxu0 0.0
  %1942 = vmatprep.subr.mxu0 0.0
  %1943 = vmatpush1.msra.mxu0 0.0
  %1944 = vmatprep.subr.mxu0 0.0
  %1945 = vmatpush1.msra.mxu0 0.0
  %1946 = vmatprep.subr.mxu0 0.0
  %1947 = vmatpush1.msra.mxu0 0.0
  %1948 = vmatprep.mubr.f32.mxu0 0.0
  %1949 = vmatmul.mubr.f32.gmra.mrb[0].mxu0 %v1879
  %v1950 = vpop.f32.mrb[0].mxu0
  %v1951 = vadd.f32 %v1877, %v1950
  %v1952 = vpop.f32.mrb[0].mxu0
  %1953 = vmatprep.mubr.f32.mxu0 0.0
  %1954 = vmatmul.mubr.f32.gmra.mrb[0].mxu0 %v1882
  %v1955 = vpop.f32.mrb[0].mxu0
  %v1956 = vadd.f32 %v1877, %v1955
  %v1957 = vpop.f32.mrb[0].mxu0
  %1958 = vdwg.mxu0
  %v1959 = vxor.u32 %v1951, 2147483648
  %v1960 = vxor.u32 %v1956, 2147483648
  %v1961 = vmul.f32 %v1959, 1.442695
  %v1962 = vpow.pop %v1961
  %v1963 = vmul.f32 %v1960, 1.442695
  %v1964 = vpow.pop %v1963
  %v1965 = vadd.f32 %v1962, 1.0
  %v1966 = vadd.f32 %v1964, 1.0
  %v1967 = vrcp.pop %v1965
  %v1968 = vmul.f32 1.0, %v1967
  %v1969 = vrcp.pop %v1966
  %v1970 = vmul.f32 1.0, %v1969
  %1972 = vset.pattern.permute.xlu0 0
  %1973 = vperm.xlu0 %1972, %v1968
  %v1974 = vpop.permute.xlu0 %1973
  %1977 = vset.pattern.permute.xlu0 0
  %1978 = vperm.xlu0 %1977, %v1970
  %v1979 = vpop.permute.xlu0 %1978
  %v1981 = vmul.f32 %v1974, %v397
  %v1982 = vmul.f32 %v1979, %v398
  %v1983 = vsub.f32 1.0, %v1968
  %v1984 = vsub.f32 1.0, %v1970
  %1986 = vset.pattern.permute.xlu0 0
  %1987 = vperm.xlu0 %1986, %v1983
  %v1988 = vpop.permute.xlu0 %1987
  %1991 = vset.pattern.permute.xlu0 0
  %1992 = vperm.xlu0 %1991, %v1984
  %v1993 = vpop.permute.xlu0 %1992
  %v1995 = vmul.f32 %v1988, %v1847
  %v1996 = vmul.f32 %v1993, %v1852
  %v1997 = vadd.f32 %v1981, %v1995
  %v1998 = vadd.f32 %v1982, %v1996
  %v1999 = vld [vmem:[%s7 + $0x48] sm:$0xff]
  %v2000 = vld [vmem:[%s7 + $0x50] sm:$0xff]
  %v2001 = vld [vmem:[%s7 + $0x58] sm:$0xff]
  %v2002 = vld [vmem:[%s7 + $0x60] sm:$0xff]
  %v2003 = vld [vmem:[%s7 + $0x68] sm:$0x1]
  %v2004 = vlaneseq
  %v2005 = vshrl.u32 %v2004, 7
  %v2006 = vsub.s32 0, %v2005
  %v2007 = vrot.slane %v2003, %v2006
  %v2009 = vsel %vm299, %v1997, 0
  %v2012 = vsel %vm299, %v1998, 0
  %2014 = vmatprep.subr.mxu0 0.0
  %2015 = vmatpush1.msra.mxu0 %v1999
  %2016 = vmatprep.subr.mxu0 0.0
  %2017 = vmatpush1.msra.mxu0 %v2000
  %2018 = vmatprep.subr.mxu0 0.0
  %2019 = vmatpush1.msra.mxu0 %v2001
  %2020 = vmatprep.subr.mxu0 0.0
  %2021 = vmatpush1.msra.mxu0 %v2002
  %2022 = vmatprep.subr.mxu0 0.0
  %2023 = vmatpush1.msra.mxu0 0.0
  %2024 = vmatprep.subr.mxu0 0.0
  %2025 = vmatpush1.msra.mxu0 0.0
  %2026 = vmatprep.subr.mxu0 0.0
  %2027 = vmatpush1.msra.mxu0 0.0
  %2028 = vmatprep.subr.mxu0 0.0
  %2029 = vmatpush1.msra.mxu0 0.0
  %2030 = vmatprep.subr.mxu0 0.0
  %2031 = vmatpush1.msra.mxu0 0.0
  %2032 = vmatprep.subr.mxu0 0.0
  %2033 = vmatpush1.msra.mxu0 0.0
  %2034 = vmatprep.subr.mxu0 0.0
  %2035 = vmatpush1.msra.mxu0 0.0
  %2036 = vmatprep.subr.mxu0 0.0
  %2037 = vmatpush1.msra.mxu0 0.0
  %2038 = vmatprep.subr.mxu0 0.0
  %2039 = vmatpush1.msra.mxu0 0.0
  %2040 = vmatprep.subr.mxu0 0.0
  %2041 = vmatpush1.msra.mxu0 0.0
  %2042 = vmatprep.subr.mxu0 0.0
  %2043 = vmatpush1.msra.mxu0 0.0
  %2044 = vmatprep.subr.mxu0 0.0
  %2045 = vmatpush1.msra.mxu0 0.0
  %2046 = vmatprep.subr.mxu0 0.0
  %2047 = vmatpush1.msra.mxu0 0.0
  %2048 = vmatprep.subr.mxu0 0.0
  %2049 = vmatpush1.msra.mxu0 0.0
  %2050 = vmatprep.subr.mxu0 0.0
  %2051 = vmatpush1.msra.mxu0 0.0
  %2052 = vmatprep.subr.mxu0 0.0
  %2053 = vmatpush1.msra.mxu0 0.0
  %2054 = vmatprep.subr.mxu0 0.0
  %2055 = vmatpush1.msra.mxu0 0.0
  %2056 = vmatprep.subr.mxu0 0.0
  %2057 = vmatpush1.msra.mxu0 0.0
  %2058 = vmatprep.subr.mxu0 0.0
  %2059 = vmatpush1.msra.mxu0 0.0
  %2060 = vmatprep.subr.mxu0 0.0
  %2061 = vmatpush1.msra.mxu0 0.0
  %2062 = vmatprep.subr.mxu0 0.0
  %2063 = vmatpush1.msra.mxu0 0.0
  %2064 = vmatprep.subr.mxu0 0.0
  %2065 = vmatpush1.msra.mxu0 0.0
  %2066 = vmatprep.subr.mxu0 0.0
  %2067 = vmatpush1.msra.mxu0 0.0
  %2068 = vmatprep.subr.mxu0 0.0
  %2069 = vmatpush1.msra.mxu0 0.0
  %2070 = vmatprep.subr.mxu0 0.0
  %2071 = vmatpush1.msra.mxu0 0.0
  %2072 = vmatprep.subr.mxu0 0.0
  %2073 = vmatpush1.msra.mxu0 0.0
  %2074 = vmatprep.subr.mxu0 0.0
  %2075 = vmatpush1.msra.mxu0 0.0
  %2076 = vmatprep.subr.mxu0 0.0
  %2077 = vmatpush1.msra.mxu0 0.0
  %2078 = vmatprep.mubr.f32.mxu0 0.0
  %2079 = vmatmul.mubr.f32.gmra.mrb[0].mxu0 %v2009
  %v2080 = vpop.f32.mrb[0].mxu0
  %v2081 = vadd.f32 %v2007, %v2080
  %v2082 = vpop.f32.mrb[0].mxu0
  %2083 = vmatprep.mubr.f32.mxu0 0.0
  %2084 = vmatmul.mubr.f32.gmra.mrb[0].mxu0 %v2012
  %v2085 = vpop.f32.mrb[0].mxu0
  %v2086 = vadd.f32 %v2007, %v2085
  %v2087 = vpop.f32.mrb[0].mxu0
  %2088 = vdwg.mxu0
  %v2089 = vld [vmem:[%s4] sm:$0xff]
  %v2090 = vld [vmem:[%s4 + $0x8] sm:$0xff]
  %v2092 = vsel %vm33, %v2089, 0
  %v2095 = vsel %vm33, %v2090, 0
  %2097 = vmatprep.subr.mxu0 0.0
  %2098 = vmatpush1.msra.mxu0 %v2081
  %2099 = vmatprep.subr.mxu0 0.0
  %2100 = vmatpush1.msra.mxu0 %v2086
  %2101 = vmatprep.subr.mxu0 0.0
  %2102 = vmatpush1.msra.mxu0 0.0
  %2103 = vmatprep.subr.mxu0 0.0
  %2104 = vmatpush1.msra.mxu0 0.0
  %2105 = vmatprep.subr.mxu0 0.0
  %2106 = vmatpush1.msra.mxu0 0.0
  %2107 = vmatprep.subr.mxu0 0.0
  %2108 = vmatpush1.msra.mxu0 0.0
  %2109 = vmatprep.subr.mxu0 0.0
  %2110 = vmatpush1.msra.mxu0 0.0
  %2111 = vmatprep.subr.mxu0 0.0
  %2112 = vmatpush1.msra.mxu0 0.0
  %2113 = vmatprep.subr.mxu0 0.0
  %2114 = vmatpush1.msra.mxu0 0.0
  %2115 = vmatprep.subr.mxu0 0.0
  %2116 = vmatpush1.msra.mxu0 0.0
  %2117 = vmatprep.subr.mxu0 0.0
  %2118 = vmatpush1.msra.mxu0 0.0
  %2119 = vmatprep.subr.mxu0 0.0
  %2120 = vmatpush1.msra.mxu0 0.0
  %2121 = vmatprep.subr.mxu0 0.0
  %2122 = vmatpush1.msra.mxu0 0.0
  %2123 = vmatprep.subr.mxu0 0.0
  %2124 = vmatpush1.msra.mxu0 0.0
  %2125 = vmatprep.subr.mxu0 0.0
  %2126 = vmatpush1.msra.mxu0 0.0
  %2127 = vmatprep.subr.mxu0 0.0
  %2128 = vmatpush1.msra.mxu0 0.0
  %2129 = vmatprep.subr.mxu0 0.0
  %2130 = vmatpush1.msra.mxu0 0.0
  %2131 = vmatprep.subr.mxu0 0.0
  %2132 = vmatpush1.msra.mxu0 0.0
  %2133 = vmatprep.subr.mxu0 0.0
  %2134 = vmatpush1.msra.mxu0 0.0
  %2135 = vmatprep.subr.mxu0 0.0
  %2136 = vmatpush1.msra.mxu0 0.0
  %2137 = vmatprep.subr.mxu0 0.0
  %2138 = vmatpush1.msra.mxu0 0.0
  %2139 = vmatprep.subr.mxu0 0.0
  %2140 = vmatpush1.msra.mxu0 0.0
  %2141 = vmatprep.subr.mxu0 0.0
  %2142 = vmatpush1.msra.mxu0 0.0
  %2143 = vmatprep.subr.mxu0 0.0
  %2144 = vmatpush1.msra.mxu0 0.0
  %2145 = vmatprep.subr.mxu0 0.0
  %2146 = vmatpush1.msra.mxu0 0.0
  %2147 = vmatprep.subr.mxu0 0.0
  %2148 = vmatpush1.msra.mxu0 0.0
  %2149 = vmatprep.subr.mxu0 0.0
  %2150 = vmatpush1.msra.mxu0 0.0
  %2151 = vmatprep.subr.mxu0 0.0
  %2152 = vmatpush1.msra.mxu0 0.0
  %2153 = vmatprep.subr.mxu0 0.0
  %2154 = vmatpush1.msra.mxu0 0.0
  %2155 = vmatprep.subr.mxu0 0.0
  %2156 = vmatpush1.msra.mxu0 0.0
  %2157 = vmatprep.subr.mxu0 0.0
  %2158 = vmatpush1.msra.mxu0 0.0
  %2159 = vmatprep.subr.mxu0 0.0
  %2160 = vmatpush1.msra.mxu0 0.0
  %2161 = vmatprep.mubr.f32.mxu0 0.0
  %2162 = vmatmul.mubr.f32.gmra.mrb[0].mxu0 %v2092
  %v2163 = vpop.f32.mrb[0].mxu0
  %v2164 = vadd.f32 0.0, %v2163
  %v2165 = vpop.f32.mrb[0].mxu0
  %2166 = vmatprep.mubr.f32.mxu0 0.0
  %2167 = vmatmul.mubr.f32.gmra.mrb[0].mxu0 %v2095
  %v2168 = vpop.f32.mrb[0].mxu0
  %v2169 = vadd.f32 0.0, %v2168
  %v2170 = vpop.f32.mrb[0].mxu0
  %2171 = vdwg.mxu0
  %v2172 = vld [vmem:[%s3] sm:$0xff]
  %2174 = vrot.lane.b32.xlu0 %v2169, 16
  %v2175 = vpop.permute.xlu0 %2174
  %2178 = vrot.lane.b32.xlu0 %v2172, 32
  %v2179 = vpop.permute.xlu0 %2178
  %v2181 = vsel %vm33, %v2164, %v2175
  %v2182 = vsel %vm299, %v2181, %v2179
  %v2183 = vld [vmem:[%s7 + $0x70] sm:$0xff]
  %v2184 = vld [vmem:[%s7 + $0x78] sm:$0xff]
  %v2185 = vld [vmem:[%s7 + $0x80] sm:$0xff]
  %v2186 = vld [vmem:[%s7 + $0x88] sm:$0xff]
  %v2187 = vld [vmem:[%s7 + $0x90] sm:$0xff]
  %v2188 = vld [vmem:[%s7 + $0x98] sm:$0xff]
  %v2189 = vld [vmem:[%s7 + $0xa0] sm:$0x1]
  %v2190 = vlaneseq
  %v2191 = vshrl.u32 %v2190, 7
  %v2192 = vsub.s32 0, %v2191
  %v2193 = vrot.slane %v2189, %v2192
  %vm2194 = vcmask 392192
  %v2196 = vsel %vm2194, %v2182, 0
  %2198 = vmatprep.subr.mxu0 0.0
  %2199 = vmatpush1.msra.mxu0 %v2183
  %2200 = vmatprep.subr.mxu0 0.0
  %2201 = vmatpush1.msra.mxu0 %v2184
  %2202 = vmatprep.subr.mxu0 0.0
  %2203 = vmatpush1.msra.mxu0 %v2185
  %2204 = vmatprep.subr.mxu0 0.0
  %2205 = vmatpush1.msra.mxu0 %v2186
  %2206 = vmatprep.subr.mxu0 0.0
  %2207 = vmatpush1.msra.mxu0 %v2187
  %2208 = vmatprep.subr.mxu0 0.0
  %2209 = vmatpush1.msra.mxu0 %v2188
  %2210 = vmatprep.subr.mxu0 0.0
  %2211 = vmatpush1.msra.mxu0 0.0
  %2212 = vmatprep.subr.mxu0 0.0
  %2213 = vmatpush1.msra.mxu0 0.0
  %2214 = vmatprep.subr.mxu0 0.0
  %2215 = vmatpush1.msra.mxu0 0.0
  %2216 = vmatprep.subr.mxu0 0.0
  %2217 = vmatpush1.msra.mxu0 0.0
  %2218 = vmatprep.subr.mxu0 0.0
  %2219 = vmatpush1.msra.mxu0 0.0
  %2220 = vmatprep.subr.mxu0 0.0
  %2221 = vmatpush1.msra.mxu0 0.0
  %2222 = vmatprep.subr.mxu0 0.0
  %2223 = vmatpush1.msra.mxu0 0.0
  %2224 = vmatprep.subr.mxu0 0.0
  %2225 = vmatpush1.msra.mxu0 0.0
  %2226 = vmatprep.subr.mxu0 0.0
  %2227 = vmatpush1.msra.mxu0 0.0
  %2228 = vmatprep.subr.mxu0 0.0
  %2229 = vmatpush1.msra.mxu0 0.0
  %2230 = vmatprep.subr.mxu0 0.0
  %2231 = vmatpush1.msra.mxu0 0.0
  %2232 = vmatprep.subr.mxu0 0.0
  %2233 = vmatpush1.msra.mxu0 0.0
  %2234 = vmatprep.subr.mxu0 0.0
  %2235 = vmatpush1.msra.mxu0 0.0
  %2236 = vmatprep.subr.mxu0 0.0
  %2237 = vmatpush1.msra.mxu0 0.0
  %2238 = vmatprep.subr.mxu0 0.0
  %2239 = vmatpush1.msra.mxu0 0.0
  %2240 = vmatprep.subr.mxu0 0.0
  %2241 = vmatpush1.msra.mxu0 0.0
  %2242 = vmatprep.subr.mxu0 0.0
  %2243 = vmatpush1.msra.mxu0 0.0
  %2244 = vmatprep.subr.mxu0 0.0
  %2245 = vmatpush1.msra.mxu0 0.0
  %2246 = vmatprep.subr.mxu0 0.0
  %2247 = vmatpush1.msra.mxu0 0.0
  %2248 = vmatprep.subr.mxu0 0.0
  %2249 = vmatpush1.msra.mxu0 0.0
  %2250 = vmatprep.subr.mxu0 0.0
  %2251 = vmatpush1.msra.mxu0 0.0
  %2252 = vmatprep.subr.mxu0 0.0
  %2253 = vmatpush1.msra.mxu0 0.0
  %2254 = vmatprep.subr.mxu0 0.0
  %2255 = vmatpush1.msra.mxu0 0.0
  %2256 = vmatprep.subr.mxu0 0.0
  %2257 = vmatpush1.msra.mxu0 0.0
  %2258 = vmatprep.subr.mxu0 0.0
  %2259 = vmatpush1.msra.mxu0 0.0
  %2260 = vmatprep.subr.mxu0 0.0
  %2261 = vmatpush1.msra.mxu0 0.0
  %2262 = vmatprep.mubr.f32.mxu0 0.0
  %2263 = vmatmul.mubr.f32.gmra.mrb[0].mxu0 %v2196
  %v2264 = vpop.f32.mrb[0].mxu0
  %v2265 = vadd.f32 %v2193, %v2264
  %v2266 = vpop.f32.mrb[0].mxu0
  %2267 = vdwg.mxu0
  %v2268 = vmax.f32 %v2265, 0.0
  %v2269 = vld [vmem:[%s7 + $0xa8] sm:$0xff]
  %v2270 = vld [vmem:[%s7 + $0xb0] sm:$0xff]
  %v2271 = vld [vmem:[%s7 + $0xb8] sm:$0x1]
  %v2272 = vlaneseq
  %v2273 = vshrl.u32 %v2272, 7
  %v2274 = vsub.s32 0, %v2273
  %v2275 = vrot.slane %v2271, %v2274
  %v2277 = vsel %vm33, %v2268, 0
  %2279 = vmatprep.subr.mxu0 0.0
  %2280 = vmatpush1.msra.mxu0 %v2269
  %2281 = vmatprep.subr.mxu0 0.0
  %2282 = vmatpush1.msra.mxu0 %v2270
  %2283 = vmatprep.subr.mxu0 0.0
  %2284 = vmatpush1.msra.mxu0 0.0
  %2285 = vmatprep.subr.mxu0 0.0
  %2286 = vmatpush1.msra.mxu0 0.0
  %2287 = vmatprep.subr.mxu0 0.0
  %2288 = vmatpush1.msra.mxu0 0.0
  %2289 = vmatprep.subr.mxu0 0.0
  %2290 = vmatpush1.msra.mxu0 0.0
  %2291 = vmatprep.subr.mxu0 0.0
  %2292 = vmatpush1.msra.mxu0 0.0
  %2293 = vmatprep.subr.mxu0 0.0
  %2294 = vmatpush1.msra.mxu0 0.0
  %2295 = vmatprep.subr.mxu0 0.0
  %2296 = vmatpush1.msra.mxu0 0.0
  %2297 = vmatprep.subr.mxu0 0.0
  %2298 = vmatpush1.msra.mxu0 0.0
  %2299 = vmatprep.subr.mxu0 0.0
  %2300 = vmatpush1.msra.mxu0 0.0
  %2301 = vmatprep.subr.mxu0 0.0
  %2302 = vmatpush1.msra.mxu0 0.0
  %2303 = vmatprep.subr.mxu0 0.0
  %2304 = vmatpush1.msra.mxu0 0.0
  %2305 = vmatprep.subr.mxu0 0.0
  %2306 = vmatpush1.msra.mxu0 0.0
  %2307 = vmatprep.subr.mxu0 0.0
  %2308 = vmatpush1.msra.mxu0 0.0
  %2309 = vmatprep.subr.mxu0 0.0
  %2310 = vmatpush1.msra.mxu0 0.0
  %2311 = vmatprep.subr.mxu0 0.0
  %2312 = vmatpush1.msra.mxu0 0.0
  %2313 = vmatprep.subr.mxu0 0.0
  %2314 = vmatpush1.msra.mxu0 0.0
  %2315 = vmatprep.subr.mxu0 0.0
  %2316 = vmatpush1.msra.mxu0 0.0
  %2317 = vmatprep.subr.mxu0 0.0
  %2318 = vmatpush1.msra.mxu0 0.0
  %2319 = vmatprep.subr.mxu0 0.0
  %2320 = vmatpush1.msra.mxu0 0.0
  %2321 = vmatprep.subr.mxu0 0.0
  %2322 = vmatpush1.msra.mxu0 0.0
  %2323 = vmatprep.subr.mxu0 0.0
  %2324 = vmatpush1.msra.mxu0 0.0
  %2325 = vmatprep.subr.mxu0 0.0
  %2326 = vmatpush1.msra.mxu0 0.0
  %2327 = vmatprep.subr.mxu0 0.0
  %2328 = vmatpush1.msra.mxu0 0.0
  %2329 = vmatprep.subr.mxu0 0.0
  %2330 = vmatpush1.msra.mxu0 0.0
  %2331 = vmatprep.subr.mxu0 0.0
  %2332 = vmatpush1.msra.mxu0 0.0
  %2333 = vmatprep.subr.mxu0 0.0
  %2334 = vmatpush1.msra.mxu0 0.0
  %2335 = vmatprep.subr.mxu0 0.0
  %2336 = vmatpush1.msra.mxu0 0.0
  %2337 = vmatprep.subr.mxu0 0.0
  %2338 = vmatpush1.msra.mxu0 0.0
  %2339 = vmatprep.subr.mxu0 0.0
  %2340 = vmatpush1.msra.mxu0 0.0
  %2341 = vmatprep.subr.mxu0 0.0
  %2342 = vmatpush1.msra.mxu0 0.0
  %2343 = vmatprep.mubr.f32.mxu0 0.0
  %2344 = vmatmul.mubr.f32.gmra.mrb[0].mxu0 %v2277
  %v2345 = vpop.f32.mrb[0].mxu0
  %v2346 = vadd.f32 %v2275, %v2345
  %v2347 = vpop.f32.mrb[0].mxu0
  %2348 = vdwg.mxu0
  %v2349 = vxor.u32 %v2346, 2147483648
  %v2350 = vmul.f32 %v2349, 1.442695
  %v2351 = vpow.pop %v2350
  %v2352 = vadd.f32 %v2351, 1.0
  %v2353 = vrcp.pop %v2352
  %v2354 = vmul.f32 1.0, %v2353
  %vm2355 = vcmask 7168
  %2356 = vst.msk [vmem:[%s8] sm:$0xff] %vm2355, %v2354
  // Predicated region
  $region34: #{tennis_forward_impl.1} parent=0 // pred_check
    _
  $region35: #{tennis_forward_impl.1} parent=0 // pred_check_branch
    %2358 = sbr.rel (0) target = $region37
  $region36: #{tennis_forward_impl.1} parent=0 // pred_region
    _
  $region37: #{tennis_forward_impl.1} parent=0 // pred_fallthru
    _
  // Predicated region
  $region38: #{tennis_forward_impl.1} parent=0 // pred_check
    _
  $region39: #{tennis_forward_impl.1} parent=0 // pred_check_branch
    %2360 = sbr.rel (0) target = $region41
  $region40: #{tennis_forward_impl.1} parent=0 // pred_region
    _
  $region41: #{tennis_forward_impl.1} parent=0 // pred_fallthru
    _

</llo_original>
